<compile_context>
chip_gen: v7x
topology: tpu7x:2x2x1
jax: 0.10.0
libtpu: 0.0.40
codegen_flags: <defaults>
</compile_context>

<pallas_src>
import functools

import jax
import jax.numpy as jnp
from jax.experimental import pallas as pl
from jax.experimental.pallas import tpu as pltpu


def _double_conv_kernel(x_ref, w1_ref, s1_ref, b1_ref, w2_ref, s2_ref, b2_ref,
                        o_ref, mid_ref, *, H, W):
    """Per-batch fused (conv3x3 -> BN -> ReLU) * 2.

    x_ref  : (C_in,  L)  linearized input, L = H*W + 2*W + 2 (zero halo)
    w*_ref : (3, 3, C_out, C_in) conv weights (tap-major)
    s*_ref : (C_out, 1) folded BN scale      b*_ref : (C_out, 1) folded bias
    o_ref  : (C_out, H*W) lane-dense output
    mid_ref: (C_mid, L) VMEM scratch holding the linearized intermediate
    """
    HW = H * W

    # Lane-index masks for the taps that wrap across rows in the linearized
    # layout.  kw==0 (dx=-1) is invalid at w==0; kw==2 (dx=+1) at w==W-1.
    lane = jax.lax.broadcasted_iota(jnp.int32, (1, HW), 1)
    w_idx = lane % W
    not_left = w_idx != 0
    not_right = w_idx != (W - 1)

    def conv3x3(src_ref, w_ref):
        c_out = w_ref.shape[2]
        acc = jnp.zeros((c_out, HW), jnp.float32)
        for kh in range(3):
            for kw in range(3):
                d = kh * W + kw                      # static lane offset
                tap = src_ref[:, pl.ds(d, HW)].astype(jnp.float32)
                if kw == 0:
                    tap = jnp.where(not_left, tap, 0.0)
                elif kw == 2:
                    tap = jnp.where(not_right, tap, 0.0)
                wk = w_ref[kh, kw].astype(jnp.float32)        # (c_out, c_in)
                acc = acc + jnp.dot(wk, tap,
                                    preferred_element_type=jnp.float32)
        return acc

    # ---- conv1 + folded BN + ReLU -------------------------------------
    y1 = conv3x3(x_ref, w1_ref)
    y1 = jnp.maximum(y1 * s1_ref[...] + b1_ref[...], 0.0)       # (C_mid, HW)

    # Stage the intermediate in the same linearized zero-halo layout (VMEM).
    mid_ref[...] = jnp.zeros_like(mid_ref)
    mid_ref[:, pl.ds(W + 1, HW)] = y1

    # ---- conv2 + folded BN + ReLU, lane-dense store -------------------
    y2 = conv3x3(mid_ref, w2_ref)
    o_ref[...] = jnp.maximum(y2 * s2_ref[...] + b2_ref[...], 0.0).astype(o_ref.dtype)


def double_conv(x, w1, b1, g1, beta1, m1, v1, w2, b2, g2, beta2, m2, v2,
                *, eps=1e-5):
    """x: (B, C_in, H, W); w*: (3, 3, C_out, C_in); BN params per channel."""
    B, C_in, H, W = x.shape
    HW = H * W
    L = HW + 2 * W + 2
    C_mid = w1.shape[2]
    C_out = w2.shape[2]

    # Linearized input with a (W+1)-zero halo on each side:
    # [1 zero | W zeros (top pad row) | x.flatten | W zeros | 1 zero]
    halo = jnp.zeros((B, C_in, W + 1), x.dtype)
    x_lin = jnp.concatenate([halo, x.reshape(B, C_in, HW), halo], axis=-1)

    # Fold conv bias + eval-mode BatchNorm into per-channel scale / bias.
    def fold_bn(gamma, beta, mean, var, conv_bias):
        scale = (gamma / jnp.sqrt(var + eps)).astype(jnp.float32)
        bias = ((conv_bias - mean) * scale + beta).astype(jnp.float32)
        return scale.reshape(-1, 1), bias.reshape(-1, 1)

    s1, bb1 = fold_bn(g1, beta1, m1, v1, b1)
    s2, bb2 = fold_bn(g2, beta2, m2, v2, b2)

    kernel = functools.partial(_double_conv_kernel, H=H, W=W)

    out_flat = pl.pallas_call(
        kernel,
        out_shape=jax.ShapeDtypeStruct((B, C_out, HW), x.dtype),
        grid=(B,),
        in_specs=[
            pl.BlockSpec((None, C_in, L), lambda b: (b, 0, 0)),        # x_lin
            pl.BlockSpec((3, 3, C_mid, C_in), lambda b: (0, 0, 0, 0)),  # w1
            pl.BlockSpec((C_mid, 1), lambda b: (0, 0)),                 # scale1
            pl.BlockSpec((C_mid, 1), lambda b: (0, 0)),                 # bias1
            pl.BlockSpec((3, 3, C_out, C_mid), lambda b: (0, 0, 0, 0)), # w2
            pl.BlockSpec((C_out, 1), lambda b: (0, 0)),                 # scale2
            pl.BlockSpec((C_out, 1), lambda b: (0, 0)),                 # bias2
        ],
        out_specs=pl.BlockSpec((None, C_out, HW), lambda b: (b, 0, 0)),
        scratch_shapes=[pltpu.VMEM((C_mid, L), jnp.float32)],
        compiler_params=pltpu.CompilerParams(
            dimension_semantics=("parallel",),
            vmem_limit_bytes=48 * 1024 * 1024,
        ),
    )(x_lin, w1, s1, bb1, w2, s2, bb2)

    return out_flat.reshape(B, C_out, H, W)


def _reference(x, w1, b1, g1, beta1, m1, v1, w2, b2, g2, beta2, m2, v2,
               eps=1e-5):
    """Pure-JAX reference: (Conv2d(3x3, pad=1) -> BN(eval) -> ReLU) * 2."""
    def block(x, w, b, g, beta, m, v):
        w_oihw = jnp.transpose(w, (2, 3, 0, 1))          # (O, I, KH, KW)
        y = jax.lax.conv_general_dilated(
            x, w_oihw, window_strides=(1, 1), padding=((1, 1), (1, 1)),
            dimension_numbers=("NCHW", "OIHW", "NCHW"),
            precision=jax.lax.Precision.HIGHEST)
        y = y + b[None, :, None, None]
        scale = g / jnp.sqrt(v + eps)
        y = (y - m[None, :, None, None]) * scale[None, :, None, None] \
            + beta[None, :, None, None]
        return jnp.maximum(y, 0.0)

    return block(block(x, w1, b1, g1, beta1, m1, v1),
                 w2, b2, g2, beta2, m2, v2)


if __name__ == "__main__":
    key = jax.random.PRNGKey(0)
    B, C_in, C_mid, C_out, H, W = 2, 4, 8, 8, 16, 16
    ks = jax.random.split(key, 13)

    x = jax.random.normal(ks[0], (B, C_in, H, W), dtype=jnp.float32)

    # conv1 weights/bias + BN1 params
    w1 = 0.3 * jax.random.normal(ks[1], (3, 3, C_mid, C_in), jnp.float32)
    b1 = 0.1 * jax.random.normal(ks[2], (C_mid,), jnp.float32)
    g1 = 1.0 + 0.1 * jax.random.normal(ks[3], (C_mid,), jnp.float32)
    beta1 = 0.1 * jax.random.normal(ks[4], (C_mid,), jnp.float32)
    m1 = 0.1 * jax.random.normal(ks[5], (C_mid,), jnp.float32)
    v1 = 0.5 + jnp.abs(jax.random.normal(ks[6], (C_mid,), jnp.float32))

    # conv2 weights/bias + BN2 params
    w2 = 0.2 * jax.random.normal(ks[7], (3, 3, C_out, C_mid), jnp.float32)
    b2 = 0.1 * jax.random.normal(ks[8], (C_out,), jnp.float32)
    g2 = 1.0 + 0.1 * jax.random.normal(ks[9], (C_out,), jnp.float32)
    beta2 = 0.1 * jax.random.normal(ks[10], (C_out,), jnp.float32)
    m2 = 0.1 * jax.random.normal(ks[11], (C_out,), jnp.float32)
    v2 = 0.5 + jnp.abs(jax.random.normal(ks[12], (C_out,), jnp.float32))

    out = double_conv(x, w1, b1, g1, beta1, m1, v1, w2, b2, g2, beta2, m2, v2)
    jax.block_until_ready(out)

    ref = _reference(x, w1, b1, g1, beta1, m1, v1, w2, b2, g2, beta2, m2, v2)
    assert out.shape == (B, C_out, H, W)
    assert jnp.allclose(out, ref, atol=1e-3, rtol=1e-3)

    print("KERNEL_OK")
</pallas_src>

<mosaic_0001>
module attributes {stable_mosaic.version = 11 : i64} {
  func.func @_double_conv_kernel(%arg0: i32, %arg1: memref<1x4x290xf32, #tpu.memory_space<vmem>>, %arg2: memref<3x3x8x4xf32, #tpu.memory_space<vmem>>, %arg3: memref<8x1xf32, #tpu.memory_space<vmem>>, %arg4: memref<8x1xf32, #tpu.memory_space<vmem>>, %arg5: memref<3x3x8x8xf32, #tpu.memory_space<vmem>>, %arg6: memref<8x1xf32, #tpu.memory_space<vmem>>, %arg7: memref<8x1xf32, #tpu.memory_space<vmem>>, %arg8: memref<1x8x256xf32, #tpu.memory_space<vmem>>, %arg9: memref<8x290xf32, #tpu.memory_space<vmem>>) attributes {dimension_semantics = [#tpu.dimension_semantics<parallel>], iteration_bounds = array<i64: 2>, scalar_prefetch = 0 : i64, scratch_operands = 1 : i64, tpu.core_type = #tpu.core_type<tc>, window_params = [{transform_indices = @transform_0, window_bounds = array<i64: 1, 4, 290>}, {pipeline_mode = #tpu.pipeline_mode<synchronous>, transform_indices = @transform_1, window_bounds = array<i64: 3, 3, 8, 4>}, {pipeline_mode = #tpu.pipeline_mode<synchronous>, transform_indices = @transform_2, window_bounds = array<i64: 8, 1>}, {pipeline_mode = #tpu.pipeline_mode<synchronous>, transform_indices = @transform_3, window_bounds = array<i64: 8, 1>}, {pipeline_mode = #tpu.pipeline_mode<synchronous>, transform_indices = @transform_4, window_bounds = array<i64: 3, 3, 8, 8>}, {pipeline_mode = #tpu.pipeline_mode<synchronous>, transform_indices = @transform_5, window_bounds = array<i64: 8, 1>}, {pipeline_mode = #tpu.pipeline_mode<synchronous>, transform_indices = @transform_6, window_bounds = array<i64: 8, 1>}, {transform_indices = @transform_7, window_bounds = array<i64: 1, 8, 256>}]} {
    %0 = tpu.iota {dimensions = array<i32: 1>} : vector<1x256xi32>
    %c16_i32 = arith.constant 16 : i32
    %c0_i32 = arith.constant 0 : i32
    %1 = arith.cmpi eq, %c16_i32, %c0_i32 : i32
    %c1_i32 = arith.constant 1 : i32
    %2 = arith.select %1, %c1_i32, %c16_i32 : i32
    %3 = vector.broadcast %2 : i32 to vector<1x256xi32>
    %4 = arith.remsi %0, %3 : vector<1x256xi32>
    %c0_i32_0 = arith.constant 0 : i32
    %5 = vector.broadcast %c0_i32_0 : i32 to vector<1x256xi32>
    %6 = arith.cmpi ne, %4, %5 : vector<1x256xi32>
    %c0_i32_1 = arith.constant 0 : i32
    %7 = vector.broadcast %c0_i32_1 : i32 to vector<1x256xi32>
    %8 = arith.cmpi slt, %4, %7 : vector<1x256xi32>
    %c0_i32_2 = arith.constant 0 : i32
    %9 = arith.cmpi slt, %2, %c0_i32_2 : i32
    %10 = vector.broadcast %9 : i1 to vector<1x256xi1>
    %11 = vector.broadcast %10 : vector<1x256xi1> to vector<1x256xi1>
    %12 = arith.xori %8, %11 : vector<1x256xi1>
    %13 = arith.andi %12, %6 : vector<1x256xi1>
    %14 = vector.broadcast %2 : i32 to vector<1x256xi32>
    %15 = arith.addi %4, %14 : vector<1x256xi32>
    %16 = arith.select %13, %15, %4 : vector<1x256xi1>, vector<1x256xi32>
    %c0_i32_3 = arith.constant 0 : i32
    %17 = vector.broadcast %c0_i32_3 : i32 to vector<1x256xi32>
    %18 = arith.cmpi ne, %16, %17 : vector<1x256xi32>
    %c15_i32 = arith.constant 15 : i32
    %19 = vector.broadcast %c15_i32 : i32 to vector<1x256xi32>
    %20 = arith.cmpi ne, %16, %19 : vector<1x256xi32>
    %cst = arith.constant 0.000000e+00 : f32
    %21 = vector.broadcast %cst : f32 to vector<8x256xf32>
    %c0 = arith.constant 0 : index
    %c0_4 = arith.constant 0 : index
    %c0_5 = arith.constant 0 : index
    %22 = vector.load %arg1[%c0, %c0_4, %c0_5] : memref<1x4x290xf32, #tpu.memory_space<vmem>>, vector<1x4x256xf32>
    %23 = vector.shape_cast %22 : vector<1x4x256xf32> to vector<4x256xf32>
    %cst_6 = arith.constant 0.000000e+00 : f32
    %24 = vector.shape_cast %18 : vector<1x256xi1> to vector<1x256xi1>
    %25 = vector.broadcast %24 : vector<1x256xi1> to vector<4x256xi1>
    %26 = vector.broadcast %cst_6 : f32 to vector<4x256xf32>
    %27 = arith.select %25, %23, %26 : vector<4x256xi1>, vector<4x256xf32>
    %c0_7 = arith.constant 0 : index
    %c0_8 = arith.constant 0 : index
    %c0_9 = arith.constant 0 : index
    %c0_10 = arith.constant 0 : index
    %28 = vector.load %arg2[%c0_7, %c0_8, %c0_9, %c0_10] : memref<3x3x8x4xf32, #tpu.memory_space<vmem>>, vector<1x1x8x4xf32>
    %29 = vector.shape_cast %28 : vector<1x1x8x4xf32> to vector<8x4xf32>
    %cst_11 = arith.constant dense<0.000000e+00> : vector<8x256xf32>
    %30 = tpu.matmul %29, %27, %cst_11 {dimension_numbers = #tpu.dot_dimension_numbers<[1], [0], [0], [1], [0, 0, 1, 1], [], []>} : vector<8x4xf32>, vector<4x256xf32>, vector<8x256xf32> -> vector<8x256xf32>
    %31 = arith.addf %21, %30 : vector<8x256xf32>
    %c0_12 = arith.constant 0 : index
    %c0_13 = arith.constant 0 : index
    %c1 = arith.constant 1 : index
    %32 = vector.load %arg1[%c0_12, %c0_13, %c1] : memref<1x4x290xf32, #tpu.memory_space<vmem>>, vector<1x4x256xf32>
    %33 = vector.shape_cast %32 : vector<1x4x256xf32> to vector<4x256xf32>
    %c0_14 = arith.constant 0 : index
    %c1_15 = arith.constant 1 : index
    %c0_16 = arith.constant 0 : index
    %c0_17 = arith.constant 0 : index
    %34 = vector.load %arg2[%c0_14, %c1_15, %c0_16, %c0_17] : memref<3x3x8x4xf32, #tpu.memory_space<vmem>>, vector<1x1x8x4xf32>
    %35 = vector.shape_cast %34 : vector<1x1x8x4xf32> to vector<8x4xf32>
    %cst_18 = arith.constant dense<0.000000e+00> : vector<8x256xf32>
    %36 = tpu.matmul %35, %33, %cst_18 {dimension_numbers = #tpu.dot_dimension_numbers<[1], [0], [0], [1], [0, 0, 1, 1], [], []>} : vector<8x4xf32>, vector<4x256xf32>, vector<8x256xf32> -> vector<8x256xf32>
    %37 = arith.addf %31, %36 : vector<8x256xf32>
    %c0_19 = arith.constant 0 : index
    %c0_20 = arith.constant 0 : index
    %c2 = arith.constant 2 : index
    %38 = vector.load %arg1[%c0_19, %c0_20, %c2] : memref<1x4x290xf32, #tpu.memory_space<vmem>>, vector<1x4x256xf32>
    %39 = vector.shape_cast %38 : vector<1x4x256xf32> to vector<4x256xf32>
    %cst_21 = arith.constant 0.000000e+00 : f32
    %40 = vector.shape_cast %20 : vector<1x256xi1> to vector<1x256xi1>
    %41 = vector.broadcast %40 : vector<1x256xi1> to vector<4x256xi1>
    %42 = vector.broadcast %cst_21 : f32 to vector<4x256xf32>
    %43 = arith.select %41, %39, %42 : vector<4x256xi1>, vector<4x256xf32>
    %c0_22 = arith.constant 0 : index
    %c2_23 = arith.constant 2 : index
    %c0_24 = arith.constant 0 : index
    %c0_25 = arith.constant 0 : index
    %44 = vector.load %arg2[%c0_22, %c2_23, %c0_24, %c0_25] : memref<3x3x8x4xf32, #tpu.memory_space<vmem>>, vector<1x1x8x4xf32>
    %45 = vector.shape_cast %44 : vector<1x1x8x4xf32> to vector<8x4xf32>
    %cst_26 = arith.constant dense<0.000000e+00> : vector<8x256xf32>
    %46 = tpu.matmul %45, %43, %cst_26 {dimension_numbers = #tpu.dot_dimension_numbers<[1], [0], [0], [1], [0, 0, 1, 1], [], []>} : vector<8x4xf32>, vector<4x256xf32>, vector<8x256xf32> -> vector<8x256xf32>
    %47 = arith.addf %37, %46 : vector<8x256xf32>
    %c0_27 = arith.constant 0 : index
    %c0_28 = arith.constant 0 : index
    %c16 = arith.constant 16 : index
    %48 = vector.load %arg1[%c0_27, %c0_28, %c16] : memref<1x4x290xf32, #tpu.memory_space<vmem>>, vector<1x4x256xf32>
    %49 = vector.shape_cast %48 : vector<1x4x256xf32> to vector<4x256xf32>
    %cst_29 = arith.constant 0.000000e+00 : f32
    %50 = vector.shape_cast %18 : vector<1x256xi1> to vector<1x256xi1>
    %51 = vector.broadcast %50 : vector<1x256xi1> to vector<4x256xi1>
    %52 = vector.broadcast %cst_29 : f32 to vector<4x256xf32>
    %53 = arith.select %51, %49, %52 : vector<4x256xi1>, vector<4x256xf32>
    %c1_30 = arith.constant 1 : index
    %c0_31 = arith.constant 0 : index
    %c0_32 = arith.constant 0 : index
    %c0_33 = arith.constant 0 : index
    %54 = vector.load %arg2[%c1_30, %c0_31, %c0_32, %c0_33] : memref<3x3x8x4xf32, #tpu.memory_space<vmem>>, vector<1x1x8x4xf32>
    %55 = vector.shape_cast %54 : vector<1x1x8x4xf32> to vector<8x4xf32>
    %cst_34 = arith.constant dense<0.000000e+00> : vector<8x256xf32>
    %56 = tpu.matmul %55, %53, %cst_34 {dimension_numbers = #tpu.dot_dimension_numbers<[1], [0], [0], [1], [0, 0, 1, 1], [], []>} : vector<8x4xf32>, vector<4x256xf32>, vector<8x256xf32> -> vector<8x256xf32>
    %57 = arith.addf %47, %56 : vector<8x256xf32>
    %c0_35 = arith.constant 0 : index
    %c0_36 = arith.constant 0 : index
    %c17 = arith.constant 17 : index
    %58 = vector.load %arg1[%c0_35, %c0_36, %c17] : memref<1x4x290xf32, #tpu.memory_space<vmem>>, vector<1x4x256xf32>
    %59 = vector.shape_cast %58 : vector<1x4x256xf32> to vector<4x256xf32>
    %c1_37 = arith.constant 1 : index
    %c1_38 = arith.constant 1 : index
    %c0_39 = arith.constant 0 : index
    %c0_40 = arith.constant 0 : index
    %60 = vector.load %arg2[%c1_37, %c1_38, %c0_39, %c0_40] : memref<3x3x8x4xf32, #tpu.memory_space<vmem>>, vector<1x1x8x4xf32>
    %61 = vector.shape_cast %60 : vector<1x1x8x4xf32> to vector<8x4xf32>
    %cst_41 = arith.constant dense<0.000000e+00> : vector<8x256xf32>
    %62 = tpu.matmul %61, %59, %cst_41 {dimension_numbers = #tpu.dot_dimension_numbers<[1], [0], [0], [1], [0, 0, 1, 1], [], []>} : vector<8x4xf32>, vector<4x256xf32>, vector<8x256xf32> -> vector<8x256xf32>
    %63 = arith.addf %57, %62 : vector<8x256xf32>
    %c0_42 = arith.constant 0 : index
    %c0_43 = arith.constant 0 : index
    %c18 = arith.constant 18 : index
    %64 = vector.load %arg1[%c0_42, %c0_43, %c18] : memref<1x4x290xf32, #tpu.memory_space<vmem>>, vector<1x4x256xf32>
    %65 = vector.shape_cast %64 : vector<1x4x256xf32> to vector<4x256xf32>
    %cst_44 = arith.constant 0.000000e+00 : f32
    %66 = vector.shape_cast %20 : vector<1x256xi1> to vector<1x256xi1>
    %67 = vector.broadcast %66 : vector<1x256xi1> to vector<4x256xi1>
    %68 = vector.broadcast %cst_44 : f32 to vector<4x256xf32>
    %69 = arith.select %67, %65, %68 : vector<4x256xi1>, vector<4x256xf32>
    %c1_45 = arith.constant 1 : index
    %c2_46 = arith.constant 2 : index
    %c0_47 = arith.constant 0 : index
    %c0_48 = arith.constant 0 : index
    %70 = vector.load %arg2[%c1_45, %c2_46, %c0_47, %c0_48] : memref<3x3x8x4xf32, #tpu.memory_space<vmem>>, vector<1x1x8x4xf32>
    %71 = vector.shape_cast %70 : vector<1x1x8x4xf32> to vector<8x4xf32>
    %cst_49 = arith.constant dense<0.000000e+00> : vector<8x256xf32>
    %72 = tpu.matmul %71, %69, %cst_49 {dimension_numbers = #tpu.dot_dimension_numbers<[1], [0], [0], [1], [0, 0, 1, 1], [], []>} : vector<8x4xf32>, vector<4x256xf32>, vector<8x256xf32> -> vector<8x256xf32>
    %73 = arith.addf %63, %72 : vector<8x256xf32>
    %c0_50 = arith.constant 0 : index
    %c0_51 = arith.constant 0 : index
    %c32 = arith.constant 32 : index
    %74 = vector.load %arg1[%c0_50, %c0_51, %c32] : memref<1x4x290xf32, #tpu.memory_space<vmem>>, vector<1x4x256xf32>
    %75 = vector.shape_cast %74 : vector<1x4x256xf32> to vector<4x256xf32>
    %cst_52 = arith.constant 0.000000e+00 : f32
    %76 = vector.shape_cast %18 : vector<1x256xi1> to vector<1x256xi1>
    %77 = vector.broadcast %76 : vector<1x256xi1> to vector<4x256xi1>
    %78 = vector.broadcast %cst_52 : f32 to vector<4x256xf32>
    %79 = arith.select %77, %75, %78 : vector<4x256xi1>, vector<4x256xf32>
    %c2_53 = arith.constant 2 : index
    %c0_54 = arith.constant 0 : index
    %c0_55 = arith.constant 0 : index
    %c0_56 = arith.constant 0 : index
    %80 = vector.load %arg2[%c2_53, %c0_54, %c0_55, %c0_56] : memref<3x3x8x4xf32, #tpu.memory_space<vmem>>, vector<1x1x8x4xf32>
    %81 = vector.shape_cast %80 : vector<1x1x8x4xf32> to vector<8x4xf32>
    %cst_57 = arith.constant dense<0.000000e+00> : vector<8x256xf32>
    %82 = tpu.matmul %81, %79, %cst_57 {dimension_numbers = #tpu.dot_dimension_numbers<[1], [0], [0], [1], [0, 0, 1, 1], [], []>} : vector<8x4xf32>, vector<4x256xf32>, vector<8x256xf32> -> vector<8x256xf32>
    %83 = arith.addf %73, %82 : vector<8x256xf32>
    %c0_58 = arith.constant 0 : index
    %c0_59 = arith.constant 0 : index
    %c33 = arith.constant 33 : index
    %84 = vector.load %arg1[%c0_58, %c0_59, %c33] : memref<1x4x290xf32, #tpu.memory_space<vmem>>, vector<1x4x256xf32>
    %85 = vector.shape_cast %84 : vector<1x4x256xf32> to vector<4x256xf32>
    %c2_60 = arith.constant 2 : index
    %c1_61 = arith.constant 1 : index
    %c0_62 = arith.constant 0 : index
    %c0_63 = arith.constant 0 : index
    %86 = vector.load %arg2[%c2_60, %c1_61, %c0_62, %c0_63] : memref<3x3x8x4xf32, #tpu.memory_space<vmem>>, vector<1x1x8x4xf32>
    %87 = vector.shape_cast %86 : vector<1x1x8x4xf32> to vector<8x4xf32>
    %cst_64 = arith.constant dense<0.000000e+00> : vector<8x256xf32>
    %88 = tpu.matmul %87, %85, %cst_64 {dimension_numbers = #tpu.dot_dimension_numbers<[1], [0], [0], [1], [0, 0, 1, 1], [], []>} : vector<8x4xf32>, vector<4x256xf32>, vector<8x256xf32> -> vector<8x256xf32>
    %89 = arith.addf %83, %88 : vector<8x256xf32>
    %c0_65 = arith.constant 0 : index
    %c0_66 = arith.constant 0 : index
    %c34 = arith.constant 34 : index
    %90 = vector.load %arg1[%c0_65, %c0_66, %c34] : memref<1x4x290xf32, #tpu.memory_space<vmem>>, vector<1x4x256xf32>
    %91 = vector.shape_cast %90 : vector<1x4x256xf32> to vector<4x256xf32>
    %cst_67 = arith.constant 0.000000e+00 : f32
    %92 = vector.shape_cast %20 : vector<1x256xi1> to vector<1x256xi1>
    %93 = vector.broadcast %92 : vector<1x256xi1> to vector<4x256xi1>
    %94 = vector.broadcast %cst_67 : f32 to vector<4x256xf32>
    %95 = arith.select %93, %91, %94 : vector<4x256xi1>, vector<4x256xf32>
    %c2_68 = arith.constant 2 : index
    %c2_69 = arith.constant 2 : index
    %c0_70 = arith.constant 0 : index
    %c0_71 = arith.constant 0 : index
    %96 = vector.load %arg2[%c2_68, %c2_69, %c0_70, %c0_71] : memref<3x3x8x4xf32, #tpu.memory_space<vmem>>, vector<1x1x8x4xf32>
    %97 = vector.shape_cast %96 : vector<1x1x8x4xf32> to vector<8x4xf32>
    %cst_72 = arith.constant dense<0.000000e+00> : vector<8x256xf32>
    %98 = tpu.matmul %97, %95, %cst_72 {dimension_numbers = #tpu.dot_dimension_numbers<[1], [0], [0], [1], [0, 0, 1, 1], [], []>} : vector<8x4xf32>, vector<4x256xf32>, vector<8x256xf32> -> vector<8x256xf32>
    %99 = arith.addf %89, %98 : vector<8x256xf32>
    %c0_73 = arith.constant 0 : index
    %c0_74 = arith.constant 0 : index
    %100 = vector.load %arg3[%c0_73, %c0_74] : memref<8x1xf32, #tpu.memory_space<vmem>>, vector<8x1xf32>
    %101 = vector.broadcast %100 : vector<8x1xf32> to vector<8x256xf32>
    %102 = arith.mulf %99, %101 : vector<8x256xf32>
    %c0_75 = arith.constant 0 : index
    %c0_76 = arith.constant 0 : index
    %103 = vector.load %arg4[%c0_75, %c0_76] : memref<8x1xf32, #tpu.memory_space<vmem>>, vector<8x1xf32>
    %104 = vector.broadcast %103 : vector<8x1xf32> to vector<8x256xf32>
    %105 = arith.addf %102, %104 : vector<8x256xf32>
    %cst_77 = arith.constant 0.000000e+00 : f32
    %106 = vector.broadcast %cst_77 : f32 to vector<8x256xf32>
    %107 = arith.maximumf %105, %106 : vector<8x256xf32>
    %cst_78 = arith.constant 0.000000e+00 : f32
    %108 = vector.broadcast %cst_78 : f32 to vector<8x290xf32>
    %c0_79 = arith.constant 0 : index
    %c0_80 = arith.constant 0 : index
    %109 = vector.load %arg9[%c0_79, %c0_80] : memref<8x290xf32, #tpu.memory_space<vmem>>, vector<8x290xf32>
    tpu.vector_store %arg9[%c0_79, %c0_80], %108 {strides = array<i32>} : memref<8x290xf32, #tpu.memory_space<vmem>>, vector<8x290xf32>,
    %c0_81 = arith.constant 0 : index
    %c17_82 = arith.constant 17 : index
    %110 = vector.load %arg9[%c0_81, %c17_82] : memref<8x290xf32, #tpu.memory_space<vmem>>, vector<8x256xf32>
    tpu.vector_store %arg9[%c0_81, %c17_82], %107 {strides = array<i32>} : memref<8x290xf32, #tpu.memory_space<vmem>>, vector<8x256xf32>,
    %cst_83 = arith.constant 0.000000e+00 : f32
    %111 = vector.broadcast %cst_83 : f32 to vector<8x256xf32>
    %c0_84 = arith.constant 0 : index
    %c0_85 = arith.constant 0 : index
    %112 = vector.load %arg9[%c0_84, %c0_85] : memref<8x290xf32, #tpu.memory_space<vmem>>, vector<8x256xf32>
    %cst_86 = arith.constant 0.000000e+00 : f32
    %113 = vector.shape_cast %18 : vector<1x256xi1> to vector<1x256xi1>
    %114 = vector.broadcast %113 : vector<1x256xi1> to vector<8x256xi1>
    %115 = vector.broadcast %cst_86 : f32 to vector<8x256xf32>
    %116 = arith.select %114, %112, %115 : vector<8x256xi1>, vector<8x256xf32>
    %c0_87 = arith.constant 0 : index
    %c0_88 = arith.constant 0 : index
    %c0_89 = arith.constant 0 : index
    %c0_90 = arith.constant 0 : index
    %117 = vector.load %arg5[%c0_87, %c0_88, %c0_89, %c0_90] : memref<3x3x8x8xf32, #tpu.memory_space<vmem>>, vector<1x1x8x8xf32>
    %118 = vector.shape_cast %117 : vector<1x1x8x8xf32> to vector<8x8xf32>
    %cst_91 = arith.constant dense<0.000000e+00> : vector<8x256xf32>
    %119 = tpu.matmul %118, %116, %cst_91 {dimension_numbers = #tpu.dot_dimension_numbers<[1], [0], [0], [1], [0, 0, 1, 1], [], []>} : vector<8x8xf32>, vector<8x256xf32>, vector<8x256xf32> -> vector<8x256xf32>
    %120 = arith.addf %111, %119 : vector<8x256xf32>
    %c0_92 = arith.constant 0 : index
    %c1_93 = arith.constant 1 : index
    %121 = vector.load %arg9[%c0_92, %c1_93] : memref<8x290xf32, #tpu.memory_space<vmem>>, vector<8x256xf32>
    %c0_94 = arith.constant 0 : index
    %c1_95 = arith.constant 1 : index
    %c0_96 = arith.constant 0 : index
    %c0_97 = arith.constant 0 : index
    %122 = vector.load %arg5[%c0_94, %c1_95, %c0_96, %c0_97] : memref<3x3x8x8xf32, #tpu.memory_space<vmem>>, vector<1x1x8x8xf32>
    %123 = vector.shape_cast %122 : vector<1x1x8x8xf32> to vector<8x8xf32>
    %cst_98 = arith.constant dense<0.000000e+00> : vector<8x256xf32>
    %124 = tpu.matmul %123, %121, %cst_98 {dimension_numbers = #tpu.dot_dimension_numbers<[1], [0], [0], [1], [0, 0, 1, 1], [], []>} : vector<8x8xf32>, vector<8x256xf32>, vector<8x256xf32> -> vector<8x256xf32>
    %125 = arith.addf %120, %124 : vector<8x256xf32>
    %c0_99 = arith.constant 0 : index
    %c2_100 = arith.constant 2 : index
    %126 = vector.load %arg9[%c0_99, %c2_100] : memref<8x290xf32, #tpu.memory_space<vmem>>, vector<8x256xf32>
    %cst_101 = arith.constant 0.000000e+00 : f32
    %127 = vector.shape_cast %20 : vector<1x256xi1> to vector<1x256xi1>
    %128 = vector.broadcast %127 : vector<1x256xi1> to vector<8x256xi1>
    %129 = vector.broadcast %cst_101 : f32 to vector<8x256xf32>
    %130 = arith.select %128, %126, %129 : vector<8x256xi1>, vector<8x256xf32>
    %c0_102 = arith.constant 0 : index
    %c2_103 = arith.constant 2 : index
    %c0_104 = arith.constant 0 : index
    %c0_105 = arith.constant 0 : index
    %131 = vector.load %arg5[%c0_102, %c2_103, %c0_104, %c0_105] : memref<3x3x8x8xf32, #tpu.memory_space<vmem>>, vector<1x1x8x8xf32>
    %132 = vector.shape_cast %131 : vector<1x1x8x8xf32> to vector<8x8xf32>
    %cst_106 = arith.constant dense<0.000000e+00> : vector<8x256xf32>
    %133 = tpu.matmul %132, %130, %cst_106 {dimension_numbers = #tpu.dot_dimension_numbers<[1], [0], [0], [1], [0, 0, 1, 1], [], []>} : vector<8x8xf32>, vector<8x256xf32>, vector<8x256xf32> -> vector<8x256xf32>
    %134 = arith.addf %125, %133 : vector<8x256xf32>
    %c0_107 = arith.constant 0 : index
    %c16_108 = arith.constant 16 : index
    %135 = vector.load %arg9[%c0_107, %c16_108] : memref<8x290xf32, #tpu.memory_space<vmem>>, vector<8x256xf32>
    %cst_109 = arith.constant 0.000000e+00 : f32
    %136 = vector.shape_cast %18 : vector<1x256xi1> to vector<1x256xi1>
    %137 = vector.broadcast %136 : vector<1x256xi1> to vector<8x256xi1>
    %138 = vector.broadcast %cst_109 : f32 to vector<8x256xf32>
    %139 = arith.select %137, %135, %138 : vector<8x256xi1>, vector<8x256xf32>
    %c1_110 = arith.constant 1 : index
    %c0_111 = arith.constant 0 : index
    %c0_112 = arith.constant 0 : index
    %c0_113 = arith.constant 0 : index
    %140 = vector.load %arg5[%c1_110, %c0_111, %c0_112, %c0_113] : memref<3x3x8x8xf32, #tpu.memory_space<vmem>>, vector<1x1x8x8xf32>
    %141 = vector.shape_cast %140 : vector<1x1x8x8xf32> to vector<8x8xf32>
    %cst_114 = arith.constant dense<0.000000e+00> : vector<8x256xf32>
    %142 = tpu.matmul %141, %139, %cst_114 {dimension_numbers = #tpu.dot_dimension_numbers<[1], [0], [0], [1], [0, 0, 1, 1], [], []>} : vector<8x8xf32>, vector<8x256xf32>, vector<8x256xf32> -> vector<8x256xf32>
    %143 = arith.addf %134, %142 : vector<8x256xf32>
    %c0_115 = arith.constant 0 : index
    %c17_116 = arith.constant 17 : index
    %144 = vector.load %arg9[%c0_115, %c17_116] : memref<8x290xf32, #tpu.memory_space<vmem>>, vector<8x256xf32>
    %c1_117 = arith.constant 1 : index
    %c1_118 = arith.constant 1 : index
    %c0_119 = arith.constant 0 : index
    %c0_120 = arith.constant 0 : index
    %145 = vector.load %arg5[%c1_117, %c1_118, %c0_119, %c0_120] : memref<3x3x8x8xf32, #tpu.memory_space<vmem>>, vector<1x1x8x8xf32>
    %146 = vector.shape_cast %145 : vector<1x1x8x8xf32> to vector<8x8xf32>
    %cst_121 = arith.constant dense<0.000000e+00> : vector<8x256xf32>
    %147 = tpu.matmul %146, %144, %cst_121 {dimension_numbers = #tpu.dot_dimension_numbers<[1], [0], [0], [1], [0, 0, 1, 1], [], []>} : vector<8x8xf32>, vector<8x256xf32>, vector<8x256xf32> -> vector<8x256xf32>
    %148 = arith.addf %143, %147 : vector<8x256xf32>
    %c0_122 = arith.constant 0 : index
    %c18_123 = arith.constant 18 : index
    %149 = vector.load %arg9[%c0_122, %c18_123] : memref<8x290xf32, #tpu.memory_space<vmem>>, vector<8x256xf32>
    %cst_124 = arith.constant 0.000000e+00 : f32
    %150 = vector.shape_cast %20 : vector<1x256xi1> to vector<1x256xi1>
    %151 = vector.broadcast %150 : vector<1x256xi1> to vector<8x256xi1>
    %152 = vector.broadcast %cst_124 : f32 to vector<8x256xf32>
    %153 = arith.select %151, %149, %152 : vector<8x256xi1>, vector<8x256xf32>
    %c1_125 = arith.constant 1 : index
    %c2_126 = arith.constant 2 : index
    %c0_127 = arith.constant 0 : index
    %c0_128 = arith.constant 0 : index
    %154 = vector.load %arg5[%c1_125, %c2_126, %c0_127, %c0_128] : memref<3x3x8x8xf32, #tpu.memory_space<vmem>>, vector<1x1x8x8xf32>
    %155 = vector.shape_cast %154 : vector<1x1x8x8xf32> to vector<8x8xf32>
    %cst_129 = arith.constant dense<0.000000e+00> : vector<8x256xf32>
    %156 = tpu.matmul %155, %153, %cst_129 {dimension_numbers = #tpu.dot_dimension_numbers<[1], [0], [0], [1], [0, 0, 1, 1], [], []>} : vector<8x8xf32>, vector<8x256xf32>, vector<8x256xf32> -> vector<8x256xf32>
    %157 = arith.addf %148, %156 : vector<8x256xf32>
    %c0_130 = arith.constant 0 : index
    %c32_131 = arith.constant 32 : index
    %158 = vector.load %arg9[%c0_130, %c32_131] : memref<8x290xf32, #tpu.memory_space<vmem>>, vector<8x256xf32>
    %cst_132 = arith.constant 0.000000e+00 : f32
    %159 = vector.shape_cast %18 : vector<1x256xi1> to vector<1x256xi1>
    %160 = vector.broadcast %159 : vector<1x256xi1> to vector<8x256xi1>
    %161 = vector.broadcast %cst_132 : f32 to vector<8x256xf32>
    %162 = arith.select %160, %158, %161 : vector<8x256xi1>, vector<8x256xf32>
    %c2_133 = arith.constant 2 : index
    %c0_134 = arith.constant 0 : index
    %c0_135 = arith.constant 0 : index
    %c0_136 = arith.constant 0 : index
    %163 = vector.load %arg5[%c2_133, %c0_134, %c0_135, %c0_136] : memref<3x3x8x8xf32, #tpu.memory_space<vmem>>, vector<1x1x8x8xf32>
    %164 = vector.shape_cast %163 : vector<1x1x8x8xf32> to vector<8x8xf32>
    %cst_137 = arith.constant dense<0.000000e+00> : vector<8x256xf32>
    %165 = tpu.matmul %164, %162, %cst_137 {dimension_numbers = #tpu.dot_dimension_numbers<[1], [0], [0], [1], [0, 0, 1, 1], [], []>} : vector<8x8xf32>, vector<8x256xf32>, vector<8x256xf32> -> vector<8x256xf32>
    %166 = arith.addf %157, %165 : vector<8x256xf32>
    %c0_138 = arith.constant 0 : index
    %c33_139 = arith.constant 33 : index
    %167 = vector.load %arg9[%c0_138, %c33_139] : memref<8x290xf32, #tpu.memory_space<vmem>>, vector<8x256xf32>
    %c2_140 = arith.constant 2 : index
    %c1_141 = arith.constant 1 : index
    %c0_142 = arith.constant 0 : index
    %c0_143 = arith.constant 0 : index
    %168 = vector.load %arg5[%c2_140, %c1_141, %c0_142, %c0_143] : memref<3x3x8x8xf32, #tpu.memory_space<vmem>>, vector<1x1x8x8xf32>
    %169 = vector.shape_cast %168 : vector<1x1x8x8xf32> to vector<8x8xf32>
    %cst_144 = arith.constant dense<0.000000e+00> : vector<8x256xf32>
    %170 = tpu.matmul %169, %167, %cst_144 {dimension_numbers = #tpu.dot_dimension_numbers<[1], [0], [0], [1], [0, 0, 1, 1], [], []>} : vector<8x8xf32>, vector<8x256xf32>, vector<8x256xf32> -> vector<8x256xf32>
    %171 = arith.addf %166, %170 : vector<8x256xf32>
    %c0_145 = arith.constant 0 : index
    %c34_146 = arith.constant 34 : index
    %172 = vector.load %arg9[%c0_145, %c34_146] : memref<8x290xf32, #tpu.memory_space<vmem>>, vector<8x256xf32>
    %cst_147 = arith.constant 0.000000e+00 : f32
    %173 = vector.shape_cast %20 : vector<1x256xi1> to vector<1x256xi1>
    %174 = vector.broadcast %173 : vector<1x256xi1> to vector<8x256xi1>
    %175 = vector.broadcast %cst_147 : f32 to vector<8x256xf32>
    %176 = arith.select %174, %172, %175 : vector<8x256xi1>, vector<8x256xf32>
    %c2_148 = arith.constant 2 : index
    %c2_149 = arith.constant 2 : index
    %c0_150 = arith.constant 0 : index
    %c0_151 = arith.constant 0 : index
    %177 = vector.load %arg5[%c2_148, %c2_149, %c0_150, %c0_151] : memref<3x3x8x8xf32, #tpu.memory_space<vmem>>, vector<1x1x8x8xf32>
    %178 = vector.shape_cast %177 : vector<1x1x8x8xf32> to vector<8x8xf32>
    %cst_152 = arith.constant dense<0.000000e+00> : vector<8x256xf32>
    %179 = tpu.matmul %178, %176, %cst_152 {dimension_numbers = #tpu.dot_dimension_numbers<[1], [0], [0], [1], [0, 0, 1, 1], [], []>} : vector<8x8xf32>, vector<8x256xf32>, vector<8x256xf32> -> vector<8x256xf32>
    %180 = arith.addf %171, %179 : vector<8x256xf32>
    %c0_153 = arith.constant 0 : index
    %c0_154 = arith.constant 0 : index
    %181 = vector.load %arg6[%c0_153, %c0_154] : memref<8x1xf32, #tpu.memory_space<vmem>>, vector<8x1xf32>
    %182 = vector.broadcast %181 : vector<8x1xf32> to vector<8x256xf32>
    %183 = arith.mulf %180, %182 : vector<8x256xf32>
    %c0_155 = arith.constant 0 : index
    %c0_156 = arith.constant 0 : index
    %184 = vector.load %arg7[%c0_155, %c0_156] : memref<8x1xf32, #tpu.memory_space<vmem>>, vector<8x1xf32>
    %185 = vector.broadcast %184 : vector<8x1xf32> to vector<8x256xf32>
    %186 = arith.addf %183, %185 : vector<8x256xf32>
    %cst_157 = arith.constant 0.000000e+00 : f32
    %187 = vector.broadcast %cst_157 : f32 to vector<8x256xf32>
    %188 = arith.maximumf %186, %187 : vector<8x256xf32>
    %c0_158 = arith.constant 0 : index
    %c0_159 = arith.constant 0 : index
    %c0_160 = arith.constant 0 : index
    %189 = vector.load %arg8[%c0_158, %c0_159, %c0_160] : memref<1x8x256xf32, #tpu.memory_space<vmem>>, vector<1x8x256xf32>
    %190 = vector.shape_cast %189 : vector<1x8x256xf32> to vector<8x256xf32>
    %191 = vector.shape_cast %188 : vector<8x256xf32> to vector<1x8x256xf32>
    tpu.vector_store %arg8[%c0_158, %c0_159, %c0_160], %191 {strides = array<i32>} : memref<1x8x256xf32, #tpu.memory_space<vmem>>, vector<1x8x256xf32>,
    return
  }
  func.func @transform_0(%arg0: i32) -> (i32, i32, i32) {
    %c0_i32 = arith.constant 0 : i32
    %c0_i32_0 = arith.constant 0 : i32
    %c0_i32_1 = arith.constant 0 : i32
    return %arg0, %c0_i32, %c0_i32_0 : i32, i32, i32
  }
  func.func @transform_1(%arg0: i32) -> (i32, i32, i32, i32) {
    %c0_i32 = arith.constant 0 : i32
    %c0_i32_0 = arith.constant 0 : i32
    %c0_i32_1 = arith.constant 0 : i32
    %c0_i32_2 = arith.constant 0 : i32
    %c0_i32_3 = arith.constant 0 : i32
    return %c0_i32, %c0_i32_0, %c0_i32_1, %c0_i32_2 : i32, i32, i32, i32
  }
  func.func @transform_2(%arg0: i32) -> (i32, i32) {
    %c0_i32 = arith.constant 0 : i32
    %c0_i32_0 = arith.constant 0 : i32
    %c0_i32_1 = arith.constant 0 : i32
    return %c0_i32, %c0_i32_0 : i32, i32
  }
  func.func @transform_3(%arg0: i32) -> (i32, i32) {
    %c0_i32 = arith.constant 0 : i32
    %c0_i32_0 = arith.constant 0 : i32
    %c0_i32_1 = arith.constant 0 : i32
    return %c0_i32, %c0_i32_0 : i32, i32
  }
  func.func @transform_4(%arg0: i32) -> (i32, i32, i32, i32) {
    %c0_i32 = arith.constant 0 : i32
    %c0_i32_0 = arith.constant 0 : i32
    %c0_i32_1 = arith.constant 0 : i32
    %c0_i32_2 = arith.constant 0 : i32
    %c0_i32_3 = arith.constant 0 : i32
    return %c0_i32, %c0_i32_0, %c0_i32_1, %c0_i32_2 : i32, i32, i32, i32
  }
  func.func @transform_5(%arg0: i32) -> (i32, i32) {
    %c0_i32 = arith.constant 0 : i32
    %c0_i32_0 = arith.constant 0 : i32
    %c0_i32_1 = arith.constant 0 : i32
    return %c0_i32, %c0_i32_0 : i32, i32
  }
  func.func @transform_6(%arg0: i32) -> (i32, i32) {
    %c0_i32 = arith.constant 0 : i32
    %c0_i32_0 = arith.constant 0 : i32
    %c0_i32_1 = arith.constant 0 : i32
    return %c0_i32, %c0_i32_0 : i32, i32
  }
  func.func @transform_7(%arg0: i32) -> (i32, i32, i32) {
    %c0_i32 = arith.constant 0 : i32
    %c0_i32_0 = arith.constant 0 : i32
    %c0_i32_1 = arith.constant 0 : i32
    return %arg0, %c0_i32, %c0_i32_0 : i32, i32, i32
  }
}

</mosaic_0001>

<llo_original>
// kernel: tpu_custom_call.1
$region0: #{tpu_custom_call.1}
  #allocation0 [shape = 'u32[]', space=smem, size = 0x4, offset = 0x4, fixed_abs, tag = 'smem constant byte address 0x4 - core index']
  #allocation1 [shape = 'u32[144,128]{1,0:T(1,128)}', space=vmem, size = 0x12000, scoped, tag = 'internal scratch']
  #allocation2 [shape = 'f32[8,290]{1,0:T(8,128)}', space=vmem, size = 0x3000, scoped, tag = 'scratch operand']
  %s0 = inlined_call_operand.vmem [shape: f32[2,4,290], index: 0, kind: input, shape index: {}]
  %s1 = inlined_call_operand.vmem [shape: f32[3,3,8,4], index: 1, kind: input, shape index: {}]
  %s2 = inlined_call_operand.vmem [shape: f32[8,1], index: 2, kind: input, shape index: {}]
  %s3 = inlined_call_operand.vmem [shape: f32[8,1], index: 3, kind: input, shape index: {}]
  %s4 = inlined_call_operand.vmem [shape: f32[3,3,8,8], index: 4, kind: input, shape index: {}]
  %s5 = inlined_call_operand.vmem [shape: f32[8,1], index: 5, kind: input, shape index: {}]
  %s6 = inlined_call_operand.vmem [shape: f32[8,1], index: 6, kind: input, shape index: {}]
  %s7 = inlined_call_operand.hbm [shape: f32[2,8,256], index: 7, kind: output, shape index: {}]
  %s8 = sld [smem:[#allocation0]]
  $region61: #{tpu_custom_call.1} parent=0
    _
  %s10 = ssub.s32 1, %s8
  %s11 = scalar_select 0, %s10, %s8
  $region1: #{tpu_custom_call.1} parent=0
    #allocation3 [shape = 'u8[16384]{0}', space=vmem, size = 0x4000, scoped, tag = 'output window, operand 0']
    #allocation4 [shape = 's32[2]{0}', space=sflag, size = 0x8, scoped, tag = 'scoped memory for tpu_custom_call.1']
    %12 = vsyncpa [#allocation4], 0
    %s13 = scalar_lea.sflag [#allocation4], 1
    %14 = vsyncpa %s13, 0
    loop: start=0, step=1, limit=4
    $region2: #{tpu_custom_call.1} parent=1 // loop_pre_header
      _
    $region3: #{tpu_custom_call.1} parent=1 // loop_header
      %s16 = sphi 0, %s20
      %p17 = scmp.ge.s32.totalorder %s16, 4
      %s26 = sphi 0, %s28
      %s29 = sphi 0, %s26
      %s30 = sphi 0, %s29
      %s46 = sphi 0, %s30
      %s50 = sphi 0, %s50
      %s52 = sphi 0, %s50
      %s53 = sphi 0, %s52
      %s67 = sphi 0, %s53
      %s71 = sphi 0, %s71
      %s73 = sphi 0, %s71
      %s74 = sphi 0, %s73
      %s88 = sphi 0, %s74
      %s92 = sphi 0, %s92
      %s94 = sphi 0, %s92
      %s95 = sphi 0, %s94
      %s109 = sphi 0, %s95
      %s113 = sphi 0, %s113
      %s115 = sphi 0, %s113
      %s116 = sphi 0, %s115
      %s130 = sphi 0, %s116
      %s134 = sphi 0, %s134
      %s136 = sphi 0, %s134
      %s137 = sphi 0, %s136
      %s151 = sphi 0, %s137
      %s155 = sphi 0, %s155
      %s157 = sphi 0, %s155
      %s158 = sphi 0, %s157
      %s172 = sphi 0, %s158
      %s178 = sphi 0, %s180
      %s181 = sphi 0, %s178
      %s182 = sphi 0, %s181
      %s198 = sphi 0, %s182
    $region4: #{tpu_custom_call.1} parent=1 // loop_header_branch
      %19 = sbr.rel (%p17) target = $region8
    $region5: #{tpu_custom_call.1} parent=1 // loop_body
      %s21 = ssub.s32 %s16, 1
      %s22 = ssub.s32 %s16, 2
      %s23 = sadd.s32 %s16, 1
      %s24 = ssub.s32 %s16, %s23
      %p25 = scmp.eq.s32.totalorder %s24, 0
      %s27 = sadd.s32 %s26, 1
      %s28 = scalar_select %p25, %s26, %s27
      %p31 = pneg %p25
      %p32 = scmp.eq.s32.totalorder %s16, 1
      %p33 = por %p31, %p32
      %p34 = scmp.ne.s32.totalorder %s26, %s29
      %p35 = scmp.eq.s32.totalorder %s16, 0
      %p36 = por %p34, %p35
      %p37 = scmp.ne.s32.totalorder %s26, %s29
      %p38 = scmp.eq.s32.totalorder %s21, 1
      %p39 = por %p37, %p38
      %p40 = scmp.ne.s32.totalorder %s29, %s30
      %p41 = scmp.eq.s32.totalorder %s21, 0
      %p42 = por %p40, %p41
      %p43 = scmp.ne.s32.totalorder %s29, %s30
      %p44 = scmp.eq.s32.totalorder %s22, 1
      %p45 = por %p43, %p44
      %p47 = scmp.ne.s32.totalorder %s30, %s46
      %p48 = scmp.eq.s32.totalorder %s22, 0
      %p49 = por %p47, %p48
      %s51 = sadd.s32 %s50, 1
      %p54 = scmp.eq.s32.totalorder %s16, 1
      %p55 = scmp.ne.s32.totalorder %s50, %s52
      %p56 = scmp.eq.s32.totalorder %s16, 0
      %p57 = por %p55, %p56
      %p58 = scmp.ne.s32.totalorder %s50, %s52
      %p59 = scmp.eq.s32.totalorder %s21, 1
      %p60 = por %p58, %p59
      %p61 = scmp.ne.s32.totalorder %s52, %s53
      %p62 = scmp.eq.s32.totalorder %s21, 0
      %p63 = por %p61, %p62
      %p64 = scmp.ne.s32.totalorder %s52, %s53
      %p65 = scmp.eq.s32.totalorder %s22, 1
      %p66 = por %p64, %p65
      %p68 = scmp.ne.s32.totalorder %s53, %s67
      %p69 = scmp.eq.s32.totalorder %s22, 0
      %p70 = por %p68, %p69
      %s72 = sadd.s32 %s71, 1
      %p75 = scmp.eq.s32.totalorder %s16, 1
      %p76 = scmp.ne.s32.totalorder %s71, %s73
      %p77 = scmp.eq.s32.totalorder %s16, 0
      %p78 = por %p76, %p77
      %p79 = scmp.ne.s32.totalorder %s71, %s73
      %p80 = scmp.eq.s32.totalorder %s21, 1
      %p81 = por %p79, %p80
      %p82 = scmp.ne.s32.totalorder %s73, %s74
      %p83 = scmp.eq.s32.totalorder %s21, 0
      %p84 = por %p82, %p83
      %p85 = scmp.ne.s32.totalorder %s73, %s74
      %p86 = scmp.eq.s32.totalorder %s22, 1
      %p87 = por %p85, %p86
      %p89 = scmp.ne.s32.totalorder %s74, %s88
      %p90 = scmp.eq.s32.totalorder %s22, 0
      %p91 = por %p89, %p90
      %s93 = sadd.s32 %s92, 1
      %p96 = scmp.eq.s32.totalorder %s16, 1
      %p97 = scmp.ne.s32.totalorder %s92, %s94
      %p98 = scmp.eq.s32.totalorder %s16, 0
      %p99 = por %p97, %p98
      %p100 = scmp.ne.s32.totalorder %s92, %s94
      %p101 = scmp.eq.s32.totalorder %s21, 1
      %p102 = por %p100, %p101
      %p103 = scmp.ne.s32.totalorder %s94, %s95
      %p104 = scmp.eq.s32.totalorder %s21, 0
      %p105 = por %p103, %p104
      %p106 = scmp.ne.s32.totalorder %s94, %s95
      %p107 = scmp.eq.s32.totalorder %s22, 1
      %p108 = por %p106, %p107
      %p110 = scmp.ne.s32.totalorder %s95, %s109
      %p111 = scmp.eq.s32.totalorder %s22, 0
      %p112 = por %p110, %p111
      %s114 = sadd.s32 %s113, 1
      %p117 = scmp.eq.s32.totalorder %s16, 1
      %p118 = scmp.ne.s32.totalorder %s113, %s115
      %p119 = scmp.eq.s32.totalorder %s16, 0
      %p120 = por %p118, %p119
      %p121 = scmp.ne.s32.totalorder %s113, %s115
      %p122 = scmp.eq.s32.totalorder %s21, 1
      %p123 = por %p121, %p122
      %p124 = scmp.ne.s32.totalorder %s115, %s116
      %p125 = scmp.eq.s32.totalorder %s21, 0
      %p126 = por %p124, %p125
      %p127 = scmp.ne.s32.totalorder %s115, %s116
      %p128 = scmp.eq.s32.totalorder %s22, 1
      %p129 = por %p127, %p128
      %p131 = scmp.ne.s32.totalorder %s116, %s130
      %p132 = scmp.eq.s32.totalorder %s22, 0
      %p133 = por %p131, %p132
      %s135 = sadd.s32 %s134, 1
      %p138 = scmp.eq.s32.totalorder %s16, 1
      %p139 = scmp.ne.s32.totalorder %s134, %s136
      %p140 = scmp.eq.s32.totalorder %s16, 0
      %p141 = por %p139, %p140
      %p142 = scmp.ne.s32.totalorder %s134, %s136
      %p143 = scmp.eq.s32.totalorder %s21, 1
      %p144 = por %p142, %p143
      %p145 = scmp.ne.s32.totalorder %s136, %s137
      %p146 = scmp.eq.s32.totalorder %s21, 0
      %p147 = por %p145, %p146
      %p148 = scmp.ne.s32.totalorder %s136, %s137
      %p149 = scmp.eq.s32.totalorder %s22, 1
      %p150 = por %p148, %p149
      %p152 = scmp.ne.s32.totalorder %s137, %s151
      %p153 = scmp.eq.s32.totalorder %s22, 0
      %p154 = por %p152, %p153
      %s156 = sadd.s32 %s155, 1
      %p159 = scmp.eq.s32.totalorder %s16, 1
      %p160 = scmp.ne.s32.totalorder %s155, %s157
      %p161 = scmp.eq.s32.totalorder %s16, 0
      %p162 = por %p160, %p161
      %p163 = scmp.ne.s32.totalorder %s155, %s157
      %p164 = scmp.eq.s32.totalorder %s21, 1
      %p165 = por %p163, %p164
      %p166 = scmp.ne.s32.totalorder %s157, %s158
      %p167 = scmp.eq.s32.totalorder %s21, 0
      %p168 = por %p166, %p167
      %p169 = scmp.ne.s32.totalorder %s157, %s158
      %p170 = scmp.eq.s32.totalorder %s22, 1
      %p171 = por %p169, %p170
      %p173 = scmp.ne.s32.totalorder %s158, %s172
      %p174 = scmp.eq.s32.totalorder %s22, 0
      %p175 = por %p173, %p174
      %s176 = ssub.s32 %s16, %s23
      %p177 = scmp.eq.s32.totalorder %s176, 0
      %s179 = sadd.s32 %s178, 1
      %s180 = scalar_select %p177, %s178, %s179
      %p183 = pneg %p177
      %p184 = scmp.eq.s32.totalorder %s16, 1
      %p185 = por %p183, %p184
      %p186 = scmp.ne.s32.totalorder %s178, %s181
      %p187 = scmp.eq.s32.totalorder %s16, 0
      %p188 = por %p186, %p187
      %p189 = scmp.ne.s32.totalorder %s178, %s181
      %p190 = scmp.eq.s32.totalorder %s21, 1
      %p191 = por %p189, %p190
      %p192 = scmp.ne.s32.totalorder %s181, %s182
      %p193 = scmp.eq.s32.totalorder %s21, 0
      %p194 = por %p192, %p193
      %p195 = scmp.ne.s32.totalorder %s181, %s182
      %p196 = scmp.eq.s32.totalorder %s22, 1
      %p197 = por %p195, %p196
      %p199 = scmp.ne.s32.totalorder %s182, %s198
      %p200 = scmp.eq.s32.totalorder %s22, 0
      %p201 = por %p199, %p200
      %p202 = scmp.le.s32.totalorder 1, %s16
      %p203 = scmp.lt.s32.totalorder %s16, 3
      %p204 = pnand %p202, %p203
      %p205 = pneg %p204
      // Predicated region
      $region9: #{tpu_custom_call.1} parent=5 // pred_check
        _
      $region10: #{tpu_custom_call.1} parent=5 // pred_check_branch
        %207 = sbr.rel (%p204) target = $region12
      $region11: #{tpu_custom_call.1} parent=5 // pred_region
        %s208 = ssub.s32 %s16, 1
        // Predicated region
        $region13: #{tpu_custom_call.1} parent=11 // pred_check
          %p209 = pneg %p63
        $region14: #{tpu_custom_call.1} parent=11 // pred_check_branch
          %211 = sbr.rel (%p209) target = $region16
        $region15: #{tpu_custom_call.1} parent=11 // pred_region
          _
        $region16: #{tpu_custom_call.1} parent=11 // pred_fallthru
          _
        // Predicated region
        $region17: #{tpu_custom_call.1} parent=11 // pred_check
          %p212 = pneg %p84
        $region18: #{tpu_custom_call.1} parent=11 // pred_check_branch
          %214 = sbr.rel (%p212) target = $region20
        $region19: #{tpu_custom_call.1} parent=11 // pred_region
          _
        $region20: #{tpu_custom_call.1} parent=11 // pred_fallthru
          _
        // Predicated region
        $region21: #{tpu_custom_call.1} parent=11 // pred_check
          %p215 = pneg %p105
        $region22: #{tpu_custom_call.1} parent=11 // pred_check_branch
          %217 = sbr.rel (%p215) target = $region24
        $region23: #{tpu_custom_call.1} parent=11 // pred_region
          _
        $region24: #{tpu_custom_call.1} parent=11 // pred_fallthru
          _
        // Predicated region
        $region25: #{tpu_custom_call.1} parent=11 // pred_check
          %p218 = pneg %p126
        $region26: #{tpu_custom_call.1} parent=11 // pred_check_branch
          %220 = sbr.rel (%p218) target = $region28
        $region27: #{tpu_custom_call.1} parent=11 // pred_region
          _
        $region28: #{tpu_custom_call.1} parent=11 // pred_fallthru
          _
        // Predicated region
        $region29: #{tpu_custom_call.1} parent=11 // pred_check
          %p221 = pneg %p147
        $region30: #{tpu_custom_call.1} parent=11 // pred_check_branch
          %223 = sbr.rel (%p221) target = $region32
        $region31: #{tpu_custom_call.1} parent=11 // pred_region
          _
        $region32: #{tpu_custom_call.1} parent=11 // pred_fallthru
          _
        // Predicated region
        $region33: #{tpu_custom_call.1} parent=11 // pred_check
          %p224 = pneg %p168
        $region34: #{tpu_custom_call.1} parent=11 // pred_check_branch
          %226 = sbr.rel (%p224) target = $region36
        $region35: #{tpu_custom_call.1} parent=11 // pred_region
          _
        $region36: #{tpu_custom_call.1} parent=11 // pred_fallthru
          _
      $region12: #{tpu_custom_call.1} parent=5 // pred_fallthru
        _
      %p227 = scmp.lt.s32.totalorder %s16, 2
      // Predicated region
      $region37: #{tpu_custom_call.1} parent=5 // pred_check
        %p228 = pneg %p227
      $region38: #{tpu_custom_call.1} parent=5 // pred_check_branch
        %230 = sbr.rel (%p228) target = $region40
      $region39: #{tpu_custom_call.1} parent=5 // pred_region
        // Predicated region
        $region41: #{tpu_custom_call.1} parent=39 // pred_check
          %p231 = pneg %p36
        $region42: #{tpu_custom_call.1} parent=39 // pred_check_branch
          %233 = sbr.rel (%p231) target = $region44
        $region43: #{tpu_custom_call.1} parent=39 // pred_region
          %p234 = scmp.lt.s32.totalorder %s16, 1
          %s235 = scalar_select %p234, %s16, 1
          %s236 = smul.addr %s235, 3
          %s237 = smul.addr %s236, 4
          %s238 = scalar_lea.vmem %s0, %s237
        $region44: #{tpu_custom_call.1} parent=39 // pred_fallthru
          _
      $region40: #{tpu_custom_call.1} parent=5 // pred_fallthru
        _
      %p239 = scmp.le.s32.totalorder 1, %s16
      %p240 = scmp.lt.s32.totalorder %s16, 3
      %p241 = pnand %p239, %p240
      %p242 = pneg %p241
      // Predicated region
      $region45: #{tpu_custom_call.1} parent=5 // pred_check
        _
      $region46: #{tpu_custom_call.1} parent=5 // pred_check_branch
        %244 = sbr.rel (%p241) target = $region48
      $region47: #{tpu_custom_call.1} parent=5 // pred_region
        %s245 = ssub.s32 %s16, 1
        %p246 = scmp.lt.s32.totalorder %s21, 1
        %s247 = scalar_select %p246, %s21, 1
        %s248 = smul.addr %s247, 3
        %s249 = smul.addr %s248, 4
        %s250 = scalar_lea.vmem %s0, %s249
        %p251 = pneg %p42
        %p252 = pneg %p39
        %p253 = pneg %p63
        %p254 = pneg %p60
        %p255 = pneg %p84
        %p256 = pneg %p81
        %p257 = pneg %p105
        %p258 = pneg %p102
        %p259 = pneg %p126
        %p260 = pneg %p123
        %p261 = pneg %p147
        %p262 = pneg %p144
        %p263 = pneg %p168
        %p264 = pneg %p165
        %p265 = pneg %p194
        %p266 = pneg %p191
        %s267 = sand.u32 %s181, 1
        %s268 = scalar_lea.sflag [#allocation4], %s267
        %s269 = sand.u32 %s181, 1
        %s270 = smul.addr %s269, 16
        %s271 = scalar_lea.vmem [#allocation3], %s270
        %p272 = scmp.lt.s32.totalorder %s21, 1
        %s273 = scalar_select %p272, %s21, 1
        %s274 = smul.addr %s273, 3
        %s275 = smul.addr %s274, 4
        %s276 = scalar_lea.vmem %s0, %s275
        %v277 = vlaneseq
        %v278 = vand.u32 %v277, 127
        %v279 = vadd.s32 %v278, 128
        %vm280 = vcmp.lt.s32.totalorder %v278, 0
        %v281 = vsub.s32 0, %v278
        %v282 = vsel %vm280, %v281, %v278
        %v283 = vshrl.u32 %v282, 4
        %v284 = vand.u32 %v282, 15
        %v285 = vsub.s32 0, %v284
        %v286 = vsel %vm280, %v285, %v284
        %vm287 = vcmp.lt.s32.totalorder %v279, 0
        %v288 = vsub.s32 0, %v279
        %v289 = vsel %vm287, %v288, %v279
        %v290 = vshrl.u32 %v289, 4
        %v291 = vand.u32 %v289, 15
        %v292 = vsub.s32 0, %v291
        %v293 = vsel %vm287, %v292, %v291
        %vm294 = vcmp.ne.s32.totalorder %v286, 0
        %vm295 = vcmp.ne.s32.totalorder %v293, 0
        %vm296 = vcmp.lt.s32.totalorder %v286, 0
        %vm297 = vcmp.lt.s32.totalorder %v293, 0
        %vm298 = vmand %vm296, %vm294
        %vm299 = vmand %vm297, %vm295
        %v300 = vadd.s32 %v286, 16
        %v301 = vadd.s32 %v293, 16
        %v302 = vsel %vm298, %v300, %v286
        %v303 = vsel %vm299, %v301, %v293
        %vm304 = vcmp.ne.s32.totalorder %v302, 0
        %vm305 = vcmp.ne.s32.totalorder %v303, 0
        %vm306 = vcmp.ne.s32.totalorder %v302, 15
        %vm307 = vcmp.ne.s32.totalorder %v303, 15
        %v308 = vld [vmem:[%s276] sm:$0xff]
        %v309 = vsel %vm304, 1, 0
        %v310 = vsel %vm305, 1, 0
        %vm311 = vcmp.eq.s32.totalorder %v309, 1
        %vm312 = vcmp.eq.s32.totalorder %v310, 1
        %v314 = vcombine.high %v308, %v308
        %v316 = vsel %vm311, %v308, 0.0
        %v317 = vsel %vm312, %v314, 0.0
        %v318 = vld [vmem:[%s1] sm:$0xff]
        %v319 = vld [vmem:[%s276 + $0x8] sm:$0xf]
        %s320 = scalar_lea.vmem %s1, 8
        %v321 = vld [vmem:[%s320] sm:$0xff]
        %323 = vrot.lane.b32.xlu0 %v308, 127
        %v324 = vpop.permute.xlu0 %323
        %325 = vrot.lane.b32.xlu0 %v314, 127
        %v326 = vpop.permute.xlu0 %325
        %327 = vrot.lane.b32.xlu0 %v319, 127
        %v328 = vpop.permute.xlu0 %327
        %vm329 = vcmask 1039360
        %v330 = vsel %vm329, %v324, %v326
        %v331 = vsel %vm329, %v326, %v328
        %vm332 = vcmask 31744
        %v334 = vsel %vm332, %v321, 0
        %vm336 = vcmask 1043456
        %v337 = vsel %vm336, %v330, 0
        %v339 = vsel %vm336, %v331, 0
        %341 = vmatprep.subr.mxu0 %v339
        %342 = vmatpush1.msra.mxu0 %v337
        %343 = vmatprep.subr.mxu0 0.0
        %344 = vmatpush1.msra.mxu0 0.0
        %345 = vmatprep.subr.mxu0 0.0
        %346 = vmatpush1.msra.mxu0 0.0
        %347 = vmatprep.subr.mxu0 0.0
        %348 = vmatpush1.msra.mxu0 0.0
        %349 = vmatprep.subr.mxu0 0.0
        %350 = vmatpush1.msra.mxu0 0.0
        %351 = vmatprep.subr.mxu0 0.0
        %352 = vmatpush1.msra.mxu0 0.0
        %353 = vmatprep.subr.mxu0 0.0
        %354 = vmatpush1.msra.mxu0 0.0
        %355 = vmatprep.subr.mxu0 0.0
        %356 = vmatpush1.msra.mxu0 0.0
        %357 = vmatprep.subr.mxu0 0.0
        %358 = vmatpush1.msra.mxu0 0.0
        %359 = vmatprep.subr.mxu0 0.0
        %360 = vmatpush1.msra.mxu0 0.0
        %361 = vmatprep.subr.mxu0 0.0
        %362 = vmatpush1.msra.mxu0 0.0
        %363 = vmatprep.subr.mxu0 0.0
        %364 = vmatpush1.msra.mxu0 0.0
        %365 = vmatprep.subr.mxu0 0.0
        %366 = vmatpush1.msra.mxu0 0.0
        %367 = vmatprep.subr.mxu0 0.0
        %368 = vmatpush1.msra.mxu0 0.0
        %369 = vmatprep.subr.mxu0 0.0
        %370 = vmatpush1.msra.mxu0 0.0
        %371 = vmatprep.subr.mxu0 0.0
        %372 = vmatpush1.msra.mxu0 0.0
        %373 = vmatprep.subr.mxu0 0.0
        %374 = vmatpush1.msra.mxu0 0.0
        %375 = vmatprep.subr.mxu0 0.0
        %376 = vmatpush1.msra.mxu0 0.0
        %377 = vmatprep.subr.mxu0 0.0
        %378 = vmatpush1.msra.mxu0 0.0
        %379 = vmatprep.subr.mxu0 0.0
        %380 = vmatpush1.msra.mxu0 0.0
        %381 = vmatprep.subr.mxu0 0.0
        %382 = vmatpush1.msra.mxu0 0.0
        %383 = vmatprep.subr.mxu0 0.0
        %384 = vmatpush1.msra.mxu0 0.0
        %385 = vmatprep.subr.mxu0 0.0
        %386 = vmatpush1.msra.mxu0 0.0
        %387 = vmatprep.subr.mxu0 0.0
        %388 = vmatpush1.msra.mxu0 0.0
        %389 = vmatprep.subr.mxu0 0.0
        %390 = vmatpush1.msra.mxu0 0.0
        %391 = vmatprep.subr.mxu0 0.0
        %392 = vmatpush1.msra.mxu0 0.0
        %393 = vmatprep.subr.mxu0 0.0
        %394 = vmatpush1.msra.mxu0 0.0
        %395 = vmatprep.subr.mxu0 0.0
        %396 = vmatpush1.msra.mxu0 0.0
        %397 = vmatprep.subr.mxu0 0.0
        %398 = vmatpush1.msra.mxu0 0.0
        %399 = vmatprep.subr.mxu0 0.0
        %400 = vmatpush1.msra.mxu0 0.0
        %401 = vmatprep.subr.mxu0 0.0
        %402 = vmatpush1.msra.mxu0 0.0
        %403 = vmatprep.subr.mxu0 0.0
        %404 = vmatpush1.msra.mxu0 0.0
        %405 = vmatprep.mubr.f32.mxu0 0.0
        %406 = vmatmul.mubr.f32.gmra.mrb[0].mxu0 %v334
        %v407 = vpop.f32.mrb[0].mxu0
        %v408 = vadd.f32 0.0, %v407
        %v409 = vpop.f32.mrb[0].mxu0
        %v410 = vadd.f32 0.0, %v409
        %411 = vdwg.mxu0
        %v413 = vsel %vm332, %v318, 0
        %v416 = vsel %vm336, %v316, 0
        %v419 = vsel %vm336, %v317, 0
        %421 = vmatprep.subr.mxu0 %v419
        %422 = vmatpush1.msra.mxu0 %v416
        %423 = vmatprep.subr.mxu0 0.0
        %424 = vmatpush1.msra.mxu0 0.0
        %425 = vmatprep.subr.mxu0 0.0
        %426 = vmatpush1.msra.mxu0 0.0
        %427 = vmatprep.subr.mxu0 0.0
        %428 = vmatpush1.msra.mxu0 0.0
        %429 = vmatprep.subr.mxu0 0.0
        %430 = vmatpush1.msra.mxu0 0.0
        %431 = vmatprep.subr.mxu0 0.0
        %432 = vmatpush1.msra.mxu0 0.0
        %433 = vmatprep.subr.mxu0 0.0
        %434 = vmatpush1.msra.mxu0 0.0
        %435 = vmatprep.subr.mxu0 0.0
        %436 = vmatpush1.msra.mxu0 0.0
        %437 = vmatprep.subr.mxu0 0.0
        %438 = vmatpush1.msra.mxu0 0.0
        %439 = vmatprep.subr.mxu0 0.0
        %440 = vmatpush1.msra.mxu0 0.0
        %441 = vmatprep.subr.mxu0 0.0
        %442 = vmatpush1.msra.mxu0 0.0
        %443 = vmatprep.subr.mxu0 0.0
        %444 = vmatpush1.msra.mxu0 0.0
        %445 = vmatprep.subr.mxu0 0.0
        %446 = vmatpush1.msra.mxu0 0.0
        %447 = vmatprep.subr.mxu0 0.0
        %448 = vmatpush1.msra.mxu0 0.0
        %449 = vmatprep.subr.mxu0 0.0
        %450 = vmatpush1.msra.mxu0 0.0
        %451 = vmatprep.subr.mxu0 0.0
        %452 = vmatpush1.msra.mxu0 0.0
        %453 = vmatprep.subr.mxu0 0.0
        %454 = vmatpush1.msra.mxu0 0.0
        %455 = vmatprep.subr.mxu0 0.0
        %456 = vmatpush1.msra.mxu0 0.0
        %457 = vmatprep.subr.mxu0 0.0
        %458 = vmatpush1.msra.mxu0 0.0
        %459 = vmatprep.subr.mxu0 0.0
        %460 = vmatpush1.msra.mxu0 0.0
        %461 = vmatprep.subr.mxu0 0.0
        %462 = vmatpush1.msra.mxu0 0.0
        %463 = vmatprep.subr.mxu0 0.0
        %464 = vmatpush1.msra.mxu0 0.0
        %465 = vmatprep.subr.mxu0 0.0
        %466 = vmatpush1.msra.mxu0 0.0
        %467 = vmatprep.subr.mxu0 0.0
        %468 = vmatpush1.msra.mxu0 0.0
        %469 = vmatprep.subr.mxu0 0.0
        %470 = vmatpush1.msra.mxu0 0.0
        %471 = vmatprep.subr.mxu0 0.0
        %472 = vmatpush1.msra.mxu0 0.0
        %473 = vmatprep.subr.mxu0 0.0
        %474 = vmatpush1.msra.mxu0 0.0
        %475 = vmatprep.subr.mxu0 0.0
        %476 = vmatpush1.msra.mxu0 0.0
        %477 = vmatprep.subr.mxu0 0.0
        %478 = vmatpush1.msra.mxu0 0.0
        %479 = vmatprep.subr.mxu0 0.0
        %480 = vmatpush1.msra.mxu0 0.0
        %481 = vmatprep.subr.mxu0 0.0
        %482 = vmatpush1.msra.mxu0 0.0
        %483 = vmatprep.subr.mxu0 0.0
        %484 = vmatpush1.msra.mxu0 0.0
        %485 = vmatprep.mubr.f32.mxu0 0.0
        %486 = vmatmul.mubr.f32.gmra.mrb[0].mxu0 %v413
        %v487 = vpop.f32.mrb[0].mxu0
        %v488 = vadd.f32 %v408, %v487
        %v489 = vpop.f32.mrb[0].mxu0
        %v490 = vadd.f32 %v410, %v489
        %491 = vdwg.mxu0
        %v492 = vld [vmem:[%s276] sm:$0xff]
        %v493 = vld [vmem:[%s276 + $0x8] sm:$0xf]
        %v494 = vsel %vm306, 1, 0
        %v495 = vsel %vm307, 1, 0
        %vm496 = vcmp.eq.s32.totalorder %v494, 1
        %vm497 = vcmp.eq.s32.totalorder %v495, 1
        %v500 = vcombine.high %v492, %v492
        %501 = vrot.lane.b32.xlu0 %v492, 126
        %v502 = vpop.permute.xlu0 %501
        %503 = vrot.lane.b32.xlu0 %v500, 126
        %v504 = vpop.permute.xlu0 %503
        %505 = vrot.lane.b32.xlu0 %v493, 126
        %v506 = vpop.permute.xlu0 %505
        %vm507 = vcmask 1031168
        %v508 = vsel %vm507, %v502, %v504
        %v509 = vsel %vm507, %v504, %v506
        %v512 = vsel %vm496, %v508, 0.0
        %v513 = vsel %vm497, %v509, 0.0
        %s514 = scalar_lea.vmem %s1, 16
        %v515 = vld [vmem:[%s514] sm:$0xff]
        %v517 = vsel %vm332, %v515, 0
        %v520 = vsel %vm336, %v512, 0
        %v523 = vsel %vm336, %v513, 0
        %525 = vmatprep.subr.mxu0 %v523
        %526 = vmatpush1.msra.mxu0 %v520
        %527 = vmatprep.subr.mxu0 0.0
        %528 = vmatpush1.msra.mxu0 0.0
        %529 = vmatprep.subr.mxu0 0.0
        %530 = vmatpush1.msra.mxu0 0.0
        %531 = vmatprep.subr.mxu0 0.0
        %532 = vmatpush1.msra.mxu0 0.0
        %533 = vmatprep.subr.mxu0 0.0
        %534 = vmatpush1.msra.mxu0 0.0
        %535 = vmatprep.subr.mxu0 0.0
        %536 = vmatpush1.msra.mxu0 0.0
        %537 = vmatprep.subr.mxu0 0.0
        %538 = vmatpush1.msra.mxu0 0.0
        %539 = vmatprep.subr.mxu0 0.0
        %540 = vmatpush1.msra.mxu0 0.0
        %541 = vmatprep.subr.mxu0 0.0
        %542 = vmatpush1.msra.mxu0 0.0
        %543 = vmatprep.subr.mxu0 0.0
        %544 = vmatpush1.msra.mxu0 0.0
        %545 = vmatprep.subr.mxu0 0.0
        %546 = vmatpush1.msra.mxu0 0.0
        %547 = vmatprep.subr.mxu0 0.0
        %548 = vmatpush1.msra.mxu0 0.0
        %549 = vmatprep.subr.mxu0 0.0
        %550 = vmatpush1.msra.mxu0 0.0
        %551 = vmatprep.subr.mxu0 0.0
        %552 = vmatpush1.msra.mxu0 0.0
        %553 = vmatprep.subr.mxu0 0.0
        %554 = vmatpush1.msra.mxu0 0.0
        %555 = vmatprep.subr.mxu0 0.0
        %556 = vmatpush1.msra.mxu0 0.0
        %557 = vmatprep.subr.mxu0 0.0
        %558 = vmatpush1.msra.mxu0 0.0
        %559 = vmatprep.subr.mxu0 0.0
        %560 = vmatpush1.msra.mxu0 0.0
        %561 = vmatprep.subr.mxu0 0.0
        %562 = vmatpush1.msra.mxu0 0.0
        %563 = vmatprep.subr.mxu0 0.0
        %564 = vmatpush1.msra.mxu0 0.0
        %565 = vmatprep.subr.mxu0 0.0
        %566 = vmatpush1.msra.mxu0 0.0
        %567 = vmatprep.subr.mxu0 0.0
        %568 = vmatpush1.msra.mxu0 0.0
        %569 = vmatprep.subr.mxu0 0.0
        %570 = vmatpush1.msra.mxu0 0.0
        %571 = vmatprep.subr.mxu0 0.0
        %572 = vmatpush1.msra.mxu0 0.0
        %573 = vmatprep.subr.mxu0 0.0
        %574 = vmatpush1.msra.mxu0 0.0
        %575 = vmatprep.subr.mxu0 0.0
        %576 = vmatpush1.msra.mxu0 0.0
        %577 = vmatprep.subr.mxu0 0.0
        %578 = vmatpush1.msra.mxu0 0.0
        %579 = vmatprep.subr.mxu0 0.0
        %580 = vmatpush1.msra.mxu0 0.0
        %581 = vmatprep.subr.mxu0 0.0
        %582 = vmatpush1.msra.mxu0 0.0
        %583 = vmatprep.subr.mxu0 0.0
        %584 = vmatpush1.msra.mxu0 0.0
        %585 = vmatprep.subr.mxu0 0.0
        %586 = vmatpush1.msra.mxu0 0.0
        %587 = vmatprep.subr.mxu0 0.0
        %588 = vmatpush1.msra.mxu0 0.0
        %589 = vmatprep.mubr.f32.mxu0 0.0
        %590 = vmatmul.mubr.f32.gmra.mrb[0].mxu0 %v517
        %v591 = vpop.f32.mrb[0].mxu0
        %v592 = vadd.f32 0.0, %v591
        %v593 = vpop.f32.mrb[0].mxu0
        %v594 = vadd.f32 0.0, %v593
        %595 = vdwg.mxu0
        %v596 = vadd.f32 %v488, %v592
        %v597 = vadd.f32 %v490, %v594
        %v598 = vld [vmem:[%s276] sm:$0xff]
        %v599 = vld [vmem:[%s276 + $0x8] sm:$0xf]
        %v602 = vcombine.high %v598, %v598
        %603 = vrot.lane.b32.xlu0 %v598, 112
        %v604 = vpop.permute.xlu0 %603
        %605 = vrot.lane.b32.xlu0 %v602, 112
        %v606 = vpop.permute.xlu0 %605
        %607 = vrot.lane.b32.xlu0 %v599, 112
        %v608 = vpop.permute.xlu0 %607
        %vm609 = vcmask 916480
        %v610 = vsel %vm609, %v604, %v606
        %v611 = vsel %vm609, %v606, %v608
        %v614 = vsel %vm311, %v610, 0.0
        %v615 = vsel %vm312, %v611, 0.0
        %s616 = scalar_lea.vmem %s1, 24
        %v617 = vld [vmem:[%s616] sm:$0xff]
        %v619 = vsel %vm332, %v617, 0
        %v622 = vsel %vm336, %v614, 0
        %v625 = vsel %vm336, %v615, 0
        %627 = vmatprep.subr.mxu0 %v625
        %628 = vmatpush1.msra.mxu0 %v622
        %629 = vmatprep.subr.mxu0 0.0
        %630 = vmatpush1.msra.mxu0 0.0
        %631 = vmatprep.subr.mxu0 0.0
        %632 = vmatpush1.msra.mxu0 0.0
        %633 = vmatprep.subr.mxu0 0.0
        %634 = vmatpush1.msra.mxu0 0.0
        %635 = vmatprep.subr.mxu0 0.0
        %636 = vmatpush1.msra.mxu0 0.0
        %637 = vmatprep.subr.mxu0 0.0
        %638 = vmatpush1.msra.mxu0 0.0
        %639 = vmatprep.subr.mxu0 0.0
        %640 = vmatpush1.msra.mxu0 0.0
        %641 = vmatprep.subr.mxu0 0.0
        %642 = vmatpush1.msra.mxu0 0.0
        %643 = vmatprep.subr.mxu0 0.0
        %644 = vmatpush1.msra.mxu0 0.0
        %645 = vmatprep.subr.mxu0 0.0
        %646 = vmatpush1.msra.mxu0 0.0
        %647 = vmatprep.subr.mxu0 0.0
        %648 = vmatpush1.msra.mxu0 0.0
        %649 = vmatprep.subr.mxu0 0.0
        %650 = vmatpush1.msra.mxu0 0.0
        %651 = vmatprep.subr.mxu0 0.0
        %652 = vmatpush1.msra.mxu0 0.0
        %653 = vmatprep.subr.mxu0 0.0
        %654 = vmatpush1.msra.mxu0 0.0
        %655 = vmatprep.subr.mxu0 0.0
        %656 = vmatpush1.msra.mxu0 0.0
        %657 = vmatprep.subr.mxu0 0.0
        %658 = vmatpush1.msra.mxu0 0.0
        %659 = vmatprep.subr.mxu0 0.0
        %660 = vmatpush1.msra.mxu0 0.0
        %661 = vmatprep.subr.mxu0 0.0
        %662 = vmatpush1.msra.mxu0 0.0
        %663 = vmatprep.subr.mxu0 0.0
        %664 = vmatpush1.msra.mxu0 0.0
        %665 = vmatprep.subr.mxu0 0.0
        %666 = vmatpush1.msra.mxu0 0.0
        %667 = vmatprep.subr.mxu0 0.0
        %668 = vmatpush1.msra.mxu0 0.0
        %669 = vmatprep.subr.mxu0 0.0
        %670 = vmatpush1.msra.mxu0 0.0
        %671 = vmatprep.subr.mxu0 0.0
        %672 = vmatpush1.msra.mxu0 0.0
        %673 = vmatprep.subr.mxu0 0.0
        %674 = vmatpush1.msra.mxu0 0.0
        %675 = vmatprep.subr.mxu0 0.0
        %676 = vmatpush1.msra.mxu0 0.0
        %677 = vmatprep.subr.mxu0 0.0
        %678 = vmatpush1.msra.mxu0 0.0
        %679 = vmatprep.subr.mxu0 0.0
        %680 = vmatpush1.msra.mxu0 0.0
        %681 = vmatprep.subr.mxu0 0.0
        %682 = vmatpush1.msra.mxu0 0.0
        %683 = vmatprep.subr.mxu0 0.0
        %684 = vmatpush1.msra.mxu0 0.0
        %685 = vmatprep.subr.mxu0 0.0
        %686 = vmatpush1.msra.mxu0 0.0
        %687 = vmatprep.subr.mxu0 0.0
        %688 = vmatpush1.msra.mxu0 0.0
        %689 = vmatprep.subr.mxu0 0.0
        %690 = vmatpush1.msra.mxu0 0.0
        %691 = vmatprep.mubr.f32.mxu0 0.0
        %692 = vmatmul.mubr.f32.gmra.mrb[0].mxu0 %v619
        %v693 = vpop.f32.mrb[0].mxu0
        %v694 = vadd.f32 0.0, %v693
        %v695 = vpop.f32.mrb[0].mxu0
        %v696 = vadd.f32 0.0, %v695
        %697 = vdwg.mxu0
        %v698 = vadd.f32 %v596, %v694
        %v699 = vadd.f32 %v597, %v696
        %v700 = vld [vmem:[%s276] sm:$0xff]
        %v701 = vld [vmem:[%s276 + $0x8] sm:$0xf]
        %s702 = scalar_lea.vmem %s1, 32
        %v703 = vld [vmem:[%s702] sm:$0xff]
        %v706 = vcombine.high %v700, %v700
        %707 = vrot.lane.b32.xlu0 %v700, 111
        %v708 = vpop.permute.xlu0 %707
        %709 = vrot.lane.b32.xlu0 %v706, 111
        %v710 = vpop.permute.xlu0 %709
        %711 = vrot.lane.b32.xlu0 %v701, 111
        %v712 = vpop.permute.xlu0 %711
        %vm713 = vcmask 908288
        %v714 = vsel %vm713, %v708, %v710
        %v715 = vsel %vm713, %v710, %v712
        %v717 = vsel %vm332, %v703, 0
        %v719 = vsel %vm336, %v714, 0
        %v721 = vsel %vm336, %v715, 0
        %723 = vmatprep.subr.mxu0 %v721
        %724 = vmatpush1.msra.mxu0 %v719
        %725 = vmatprep.subr.mxu0 0.0
        %726 = vmatpush1.msra.mxu0 0.0
        %727 = vmatprep.subr.mxu0 0.0
        %728 = vmatpush1.msra.mxu0 0.0
        %729 = vmatprep.subr.mxu0 0.0
        %730 = vmatpush1.msra.mxu0 0.0
        %731 = vmatprep.subr.mxu0 0.0
        %732 = vmatpush1.msra.mxu0 0.0
        %733 = vmatprep.subr.mxu0 0.0
        %734 = vmatpush1.msra.mxu0 0.0
        %735 = vmatprep.subr.mxu0 0.0
        %736 = vmatpush1.msra.mxu0 0.0
        %737 = vmatprep.subr.mxu0 0.0
        %738 = vmatpush1.msra.mxu0 0.0
        %739 = vmatprep.subr.mxu0 0.0
        %740 = vmatpush1.msra.mxu0 0.0
        %741 = vmatprep.subr.mxu0 0.0
        %742 = vmatpush1.msra.mxu0 0.0
        %743 = vmatprep.subr.mxu0 0.0
        %744 = vmatpush1.msra.mxu0 0.0
        %745 = vmatprep.subr.mxu0 0.0
        %746 = vmatpush1.msra.mxu0 0.0
        %747 = vmatprep.subr.mxu0 0.0
        %748 = vmatpush1.msra.mxu0 0.0
        %749 = vmatprep.subr.mxu0 0.0
        %750 = vmatpush1.msra.mxu0 0.0
        %751 = vmatprep.subr.mxu0 0.0
        %752 = vmatpush1.msra.mxu0 0.0
        %753 = vmatprep.subr.mxu0 0.0
        %754 = vmatpush1.msra.mxu0 0.0
        %755 = vmatprep.subr.mxu0 0.0
        %756 = vmatpush1.msra.mxu0 0.0
        %757 = vmatprep.subr.mxu0 0.0
        %758 = vmatpush1.msra.mxu0 0.0
        %759 = vmatprep.subr.mxu0 0.0
        %760 = vmatpush1.msra.mxu0 0.0
        %761 = vmatprep.subr.mxu0 0.0
        %762 = vmatpush1.msra.mxu0 0.0
        %763 = vmatprep.subr.mxu0 0.0
        %764 = vmatpush1.msra.mxu0 0.0
        %765 = vmatprep.subr.mxu0 0.0
        %766 = vmatpush1.msra.mxu0 0.0
        %767 = vmatprep.subr.mxu0 0.0
        %768 = vmatpush1.msra.mxu0 0.0
        %769 = vmatprep.subr.mxu0 0.0
        %770 = vmatpush1.msra.mxu0 0.0
        %771 = vmatprep.subr.mxu0 0.0
        %772 = vmatpush1.msra.mxu0 0.0
        %773 = vmatprep.subr.mxu0 0.0
        %774 = vmatpush1.msra.mxu0 0.0
        %775 = vmatprep.subr.mxu0 0.0
        %776 = vmatpush1.msra.mxu0 0.0
        %777 = vmatprep.subr.mxu0 0.0
        %778 = vmatpush1.msra.mxu0 0.0
        %779 = vmatprep.subr.mxu0 0.0
        %780 = vmatpush1.msra.mxu0 0.0
        %781 = vmatprep.subr.mxu0 0.0
        %782 = vmatpush1.msra.mxu0 0.0
        %783 = vmatprep.subr.mxu0 0.0
        %784 = vmatpush1.msra.mxu0 0.0
        %785 = vmatprep.subr.mxu0 0.0
        %786 = vmatpush1.msra.mxu0 0.0
        %787 = vmatprep.mubr.f32.mxu0 0.0
        %788 = vmatmul.mubr.f32.gmra.mrb[0].mxu0 %v717
        %v789 = vpop.f32.mrb[0].mxu0
        %v790 = vadd.f32 0.0, %v789
        %v791 = vpop.f32.mrb[0].mxu0
        %v792 = vadd.f32 0.0, %v791
        %793 = vdwg.mxu0
        %v794 = vadd.f32 %v698, %v790
        %v795 = vadd.f32 %v699, %v792
        %v796 = vld [vmem:[%s276] sm:$0xff]
        %v797 = vld [vmem:[%s276 + $0x8] sm:$0xf]
        %v800 = vcombine.high %v796, %v796
        %801 = vrot.lane.b32.xlu0 %v796, 110
        %v802 = vpop.permute.xlu0 %801
        %803 = vrot.lane.b32.xlu0 %v800, 110
        %v804 = vpop.permute.xlu0 %803
        %805 = vrot.lane.b32.xlu0 %v797, 110
        %v806 = vpop.permute.xlu0 %805
        %vm807 = vcmask 900096
        %v808 = vsel %vm807, %v802, %v804
        %v809 = vsel %vm807, %v804, %v806
        %v812 = vsel %vm496, %v808, 0.0
        %v813 = vsel %vm497, %v809, 0.0
        %s814 = scalar_lea.vmem %s1, 40
        %v815 = vld [vmem:[%s814] sm:$0xff]
        %v817 = vsel %vm332, %v815, 0
        %v820 = vsel %vm336, %v812, 0
        %v823 = vsel %vm336, %v813, 0
        %825 = vmatprep.subr.mxu0 %v823
        %826 = vmatpush1.msra.mxu0 %v820
        %827 = vmatprep.subr.mxu0 0.0
        %828 = vmatpush1.msra.mxu0 0.0
        %829 = vmatprep.subr.mxu0 0.0
        %830 = vmatpush1.msra.mxu0 0.0
        %831 = vmatprep.subr.mxu0 0.0
        %832 = vmatpush1.msra.mxu0 0.0
        %833 = vmatprep.subr.mxu0 0.0
        %834 = vmatpush1.msra.mxu0 0.0
        %835 = vmatprep.subr.mxu0 0.0
        %836 = vmatpush1.msra.mxu0 0.0
        %837 = vmatprep.subr.mxu0 0.0
        %838 = vmatpush1.msra.mxu0 0.0
        %839 = vmatprep.subr.mxu0 0.0
        %840 = vmatpush1.msra.mxu0 0.0
        %841 = vmatprep.subr.mxu0 0.0
        %842 = vmatpush1.msra.mxu0 0.0
        %843 = vmatprep.subr.mxu0 0.0
        %844 = vmatpush1.msra.mxu0 0.0
        %845 = vmatprep.subr.mxu0 0.0
        %846 = vmatpush1.msra.mxu0 0.0
        %847 = vmatprep.subr.mxu0 0.0
        %848 = vmatpush1.msra.mxu0 0.0
        %849 = vmatprep.subr.mxu0 0.0
        %850 = vmatpush1.msra.mxu0 0.0
        %851 = vmatprep.subr.mxu0 0.0
        %852 = vmatpush1.msra.mxu0 0.0
        %853 = vmatprep.subr.mxu0 0.0
        %854 = vmatpush1.msra.mxu0 0.0
        %855 = vmatprep.subr.mxu0 0.0
        %856 = vmatpush1.msra.mxu0 0.0
        %857 = vmatprep.subr.mxu0 0.0
        %858 = vmatpush1.msra.mxu0 0.0
        %859 = vmatprep.subr.mxu0 0.0
        %860 = vmatpush1.msra.mxu0 0.0
        %861 = vmatprep.subr.mxu0 0.0
        %862 = vmatpush1.msra.mxu0 0.0
        %863 = vmatprep.subr.mxu0 0.0
        %864 = vmatpush1.msra.mxu0 0.0
        %865 = vmatprep.subr.mxu0 0.0
        %866 = vmatpush1.msra.mxu0 0.0
        %867 = vmatprep.subr.mxu0 0.0
        %868 = vmatpush1.msra.mxu0 0.0
        %869 = vmatprep.subr.mxu0 0.0
        %870 = vmatpush1.msra.mxu0 0.0
        %871 = vmatprep.subr.mxu0 0.0
        %872 = vmatpush1.msra.mxu0 0.0
        %873 = vmatprep.subr.mxu0 0.0
        %874 = vmatpush1.msra.mxu0 0.0
        %875 = vmatprep.subr.mxu0 0.0
        %876 = vmatpush1.msra.mxu0 0.0
        %877 = vmatprep.subr.mxu0 0.0
        %878 = vmatpush1.msra.mxu0 0.0
        %879 = vmatprep.subr.mxu0 0.0
        %880 = vmatpush1.msra.mxu0 0.0
        %881 = vmatprep.subr.mxu0 0.0
        %882 = vmatpush1.msra.mxu0 0.0
        %883 = vmatprep.subr.mxu0 0.0
        %884 = vmatpush1.msra.mxu0 0.0
        %885 = vmatprep.subr.mxu0 0.0
        %886 = vmatpush1.msra.mxu0 0.0
        %887 = vmatprep.subr.mxu0 0.0
        %888 = vmatpush1.msra.mxu0 0.0
        %889 = vmatprep.mubr.f32.mxu0 0.0
        %890 = vmatmul.mubr.f32.gmra.mrb[0].mxu0 %v817
        %v891 = vpop.f32.mrb[0].mxu0
        %v892 = vadd.f32 0.0, %v891
        %v893 = vpop.f32.mrb[0].mxu0
        %v894 = vadd.f32 0.0, %v893
        %895 = vdwg.mxu0
        %v896 = vadd.f32 %v794, %v892
        %v897 = vadd.f32 %v795, %v894
        %v898 = vld [vmem:[%s276] sm:$0xff]
        %v899 = vld [vmem:[%s276 + $0x8] sm:$0xf]
        %v902 = vcombine.high %v898, %v898
        %903 = vrot.lane.b32.xlu0 %v898, 96
        %v904 = vpop.permute.xlu0 %903
        %905 = vrot.lane.b32.xlu0 %v902, 96
        %v906 = vpop.permute.xlu0 %905
        %907 = vrot.lane.b32.xlu0 %v899, 96
        %v908 = vpop.permute.xlu0 %907
        %vm909 = vcmask 785408
        %v910 = vsel %vm909, %v904, %v906
        %v911 = vsel %vm909, %v906, %v908
        %v914 = vsel %vm311, %v910, 0.0
        %v915 = vsel %vm312, %v911, 0.0
        %s916 = scalar_lea.vmem %s1, 48
        %v917 = vld [vmem:[%s916] sm:$0xff]
        %v919 = vsel %vm332, %v917, 0
        %v922 = vsel %vm336, %v914, 0
        %v925 = vsel %vm336, %v915, 0
        %927 = vmatprep.subr.mxu0 %v925
        %928 = vmatpush1.msra.mxu0 %v922
        %929 = vmatprep.subr.mxu0 0.0
        %930 = vmatpush1.msra.mxu0 0.0
        %931 = vmatprep.subr.mxu0 0.0
        %932 = vmatpush1.msra.mxu0 0.0
        %933 = vmatprep.subr.mxu0 0.0
        %934 = vmatpush1.msra.mxu0 0.0
        %935 = vmatprep.subr.mxu0 0.0
        %936 = vmatpush1.msra.mxu0 0.0
        %937 = vmatprep.subr.mxu0 0.0
        %938 = vmatpush1.msra.mxu0 0.0
        %939 = vmatprep.subr.mxu0 0.0
        %940 = vmatpush1.msra.mxu0 0.0
        %941 = vmatprep.subr.mxu0 0.0
        %942 = vmatpush1.msra.mxu0 0.0
        %943 = vmatprep.subr.mxu0 0.0
        %944 = vmatpush1.msra.mxu0 0.0
        %945 = vmatprep.subr.mxu0 0.0
        %946 = vmatpush1.msra.mxu0 0.0
        %947 = vmatprep.subr.mxu0 0.0
        %948 = vmatpush1.msra.mxu0 0.0
        %949 = vmatprep.subr.mxu0 0.0
        %950 = vmatpush1.msra.mxu0 0.0
        %951 = vmatprep.subr.mxu0 0.0
        %952 = vmatpush1.msra.mxu0 0.0
        %953 = vmatprep.subr.mxu0 0.0
        %954 = vmatpush1.msra.mxu0 0.0
        %955 = vmatprep.subr.mxu0 0.0
        %956 = vmatpush1.msra.mxu0 0.0
        %957 = vmatprep.subr.mxu0 0.0
        %958 = vmatpush1.msra.mxu0 0.0
        %959 = vmatprep.subr.mxu0 0.0
        %960 = vmatpush1.msra.mxu0 0.0
        %961 = vmatprep.subr.mxu0 0.0
        %962 = vmatpush1.msra.mxu0 0.0
        %963 = vmatprep.subr.mxu0 0.0
        %964 = vmatpush1.msra.mxu0 0.0
        %965 = vmatprep.subr.mxu0 0.0
        %966 = vmatpush1.msra.mxu0 0.0
        %967 = vmatprep.subr.mxu0 0.0
        %968 = vmatpush1.msra.mxu0 0.0
        %969 = vmatprep.subr.mxu0 0.0
        %970 = vmatpush1.msra.mxu0 0.0
        %971 = vmatprep.subr.mxu0 0.0
        %972 = vmatpush1.msra.mxu0 0.0
        %973 = vmatprep.subr.mxu0 0.0
        %974 = vmatpush1.msra.mxu0 0.0
        %975 = vmatprep.subr.mxu0 0.0
        %976 = vmatpush1.msra.mxu0 0.0
        %977 = vmatprep.subr.mxu0 0.0
        %978 = vmatpush1.msra.mxu0 0.0
        %979 = vmatprep.subr.mxu0 0.0
        %980 = vmatpush1.msra.mxu0 0.0
        %981 = vmatprep.subr.mxu0 0.0
        %982 = vmatpush1.msra.mxu0 0.0
        %983 = vmatprep.subr.mxu0 0.0
        %984 = vmatpush1.msra.mxu0 0.0
        %985 = vmatprep.subr.mxu0 0.0
        %986 = vmatpush1.msra.mxu0 0.0
        %987 = vmatprep.subr.mxu0 0.0
        %988 = vmatpush1.msra.mxu0 0.0
        %989 = vmatprep.subr.mxu0 0.0
        %990 = vmatpush1.msra.mxu0 0.0
        %991 = vmatprep.mubr.f32.mxu0 0.0
        %992 = vmatmul.mubr.f32.gmra.mrb[0].mxu0 %v919
        %v993 = vpop.f32.mrb[0].mxu0
        %v994 = vadd.f32 0.0, %v993
        %v995 = vpop.f32.mrb[0].mxu0
        %v996 = vadd.f32 0.0, %v995
        %997 = vdwg.mxu0
        %v998 = vadd.f32 %v896, %v994
        %v999 = vadd.f32 %v897, %v996
        %v1000 = vld [vmem:[%s276] sm:$0xff]
        %v1001 = vld [vmem:[%s276 + $0x8] sm:$0xf]
        %s1002 = scalar_lea.vmem %s1, 56
        %v1003 = vld [vmem:[%s1002] sm:$0xff]
        %v1006 = vcombine.high %v1000, %v1000
        %1007 = vrot.lane.b32.xlu0 %v1000, 95
        %v1008 = vpop.permute.xlu0 %1007
        %1009 = vrot.lane.b32.xlu0 %v1006, 95
        %v1010 = vpop.permute.xlu0 %1009
        %1011 = vrot.lane.b32.xlu0 %v1001, 95
        %v1012 = vpop.permute.xlu0 %1011
        %vm1013 = vcmask 777216
        %v1014 = vsel %vm1013, %v1008, %v1010
        %v1015 = vsel %vm1013, %v1010, %v1012
        %v1017 = vsel %vm332, %v1003, 0
        %v1019 = vsel %vm336, %v1014, 0
        %v1021 = vsel %vm336, %v1015, 0
        %1023 = vmatprep.subr.mxu0 %v1021
        %1024 = vmatpush1.msra.mxu0 %v1019
        %1025 = vmatprep.subr.mxu0 0.0
        %1026 = vmatpush1.msra.mxu0 0.0
        %1027 = vmatprep.subr.mxu0 0.0
        %1028 = vmatpush1.msra.mxu0 0.0
        %1029 = vmatprep.subr.mxu0 0.0
        %1030 = vmatpush1.msra.mxu0 0.0
        %1031 = vmatprep.subr.mxu0 0.0
        %1032 = vmatpush1.msra.mxu0 0.0
        %1033 = vmatprep.subr.mxu0 0.0
        %1034 = vmatpush1.msra.mxu0 0.0
        %1035 = vmatprep.subr.mxu0 0.0
        %1036 = vmatpush1.msra.mxu0 0.0
        %1037 = vmatprep.subr.mxu0 0.0
        %1038 = vmatpush1.msra.mxu0 0.0
        %1039 = vmatprep.subr.mxu0 0.0
        %1040 = vmatpush1.msra.mxu0 0.0
        %1041 = vmatprep.subr.mxu0 0.0
        %1042 = vmatpush1.msra.mxu0 0.0
        %1043 = vmatprep.subr.mxu0 0.0
        %1044 = vmatpush1.msra.mxu0 0.0
        %1045 = vmatprep.subr.mxu0 0.0
        %1046 = vmatpush1.msra.mxu0 0.0
        %1047 = vmatprep.subr.mxu0 0.0
        %1048 = vmatpush1.msra.mxu0 0.0
        %1049 = vmatprep.subr.mxu0 0.0
        %1050 = vmatpush1.msra.mxu0 0.0
        %1051 = vmatprep.subr.mxu0 0.0
        %1052 = vmatpush1.msra.mxu0 0.0
        %1053 = vmatprep.subr.mxu0 0.0
        %1054 = vmatpush1.msra.mxu0 0.0
        %1055 = vmatprep.subr.mxu0 0.0
        %1056 = vmatpush1.msra.mxu0 0.0
        %1057 = vmatprep.subr.mxu0 0.0
        %1058 = vmatpush1.msra.mxu0 0.0
        %1059 = vmatprep.subr.mxu0 0.0
        %1060 = vmatpush1.msra.mxu0 0.0
        %1061 = vmatprep.subr.mxu0 0.0
        %1062 = vmatpush1.msra.mxu0 0.0
        %1063 = vmatprep.subr.mxu0 0.0
        %1064 = vmatpush1.msra.mxu0 0.0
        %1065 = vmatprep.subr.mxu0 0.0
        %1066 = vmatpush1.msra.mxu0 0.0
        %1067 = vmatprep.subr.mxu0 0.0
        %1068 = vmatpush1.msra.mxu0 0.0
        %1069 = vmatprep.subr.mxu0 0.0
        %1070 = vmatpush1.msra.mxu0 0.0
        %1071 = vmatprep.subr.mxu0 0.0
        %1072 = vmatpush1.msra.mxu0 0.0
        %1073 = vmatprep.subr.mxu0 0.0
        %1074 = vmatpush1.msra.mxu0 0.0
        %1075 = vmatprep.subr.mxu0 0.0
        %1076 = vmatpush1.msra.mxu0 0.0
        %1077 = vmatprep.subr.mxu0 0.0
        %1078 = vmatpush1.msra.mxu0 0.0
        %1079 = vmatprep.subr.mxu0 0.0
        %1080 = vmatpush1.msra.mxu0 0.0
        %1081 = vmatprep.subr.mxu0 0.0
        %1082 = vmatpush1.msra.mxu0 0.0
        %1083 = vmatprep.subr.mxu0 0.0
        %1084 = vmatpush1.msra.mxu0 0.0
        %1085 = vmatprep.subr.mxu0 0.0
        %1086 = vmatpush1.msra.mxu0 0.0
        %1087 = vmatprep.mubr.f32.mxu0 0.0
        %1088 = vmatmul.mubr.f32.gmra.mrb[0].mxu0 %v1017
        %v1089 = vpop.f32.mrb[0].mxu0
        %v1090 = vadd.f32 0.0, %v1089
        %v1091 = vpop.f32.mrb[0].mxu0
        %v1092 = vadd.f32 0.0, %v1091
        %1093 = vdwg.mxu0
        %v1094 = vadd.f32 %v998, %v1090
        %v1095 = vadd.f32 %v999, %v1092
        %v1096 = vld [vmem:[%s276] sm:$0xff]
        %v1097 = vld [vmem:[%s276 + $0x8] sm:$0xf]
        %v1100 = vcombine.high %v1096, %v1096
        %1101 = vrot.lane.b32.xlu0 %v1096, 94
        %v1102 = vpop.permute.xlu0 %1101
        %1103 = vrot.lane.b32.xlu0 %v1100, 94
        %v1104 = vpop.permute.xlu0 %1103
        %1105 = vrot.lane.b32.xlu0 %v1097, 94
        %v1106 = vpop.permute.xlu0 %1105
        %vm1107 = vcmask 769024
        %v1108 = vsel %vm1107, %v1102, %v1104
        %v1109 = vsel %vm1107, %v1104, %v1106
        %v1112 = vsel %vm496, %v1108, 0.0
        %v1113 = vsel %vm497, %v1109, 0.0
        %s1114 = scalar_lea.vmem %s1, 64
        %v1115 = vld [vmem:[%s1114] sm:$0xff]
        %v1117 = vsel %vm332, %v1115, 0
        %v1120 = vsel %vm336, %v1112, 0
        %v1123 = vsel %vm336, %v1113, 0
        %1125 = vmatprep.subr.mxu0 %v1123
        %1126 = vmatpush1.msra.mxu0 %v1120
        %1127 = vmatprep.subr.mxu0 0.0
        %1128 = vmatpush1.msra.mxu0 0.0
        %1129 = vmatprep.subr.mxu0 0.0
        %1130 = vmatpush1.msra.mxu0 0.0
        %1131 = vmatprep.subr.mxu0 0.0
        %1132 = vmatpush1.msra.mxu0 0.0
        %1133 = vmatprep.subr.mxu0 0.0
        %1134 = vmatpush1.msra.mxu0 0.0
        %1135 = vmatprep.subr.mxu0 0.0
        %1136 = vmatpush1.msra.mxu0 0.0
        %1137 = vmatprep.subr.mxu0 0.0
        %1138 = vmatpush1.msra.mxu0 0.0
        %1139 = vmatprep.subr.mxu0 0.0
        %1140 = vmatpush1.msra.mxu0 0.0
        %1141 = vmatprep.subr.mxu0 0.0
        %1142 = vmatpush1.msra.mxu0 0.0
        %1143 = vmatprep.subr.mxu0 0.0
        %1144 = vmatpush1.msra.mxu0 0.0
        %1145 = vmatprep.subr.mxu0 0.0
        %1146 = vmatpush1.msra.mxu0 0.0
        %1147 = vmatprep.subr.mxu0 0.0
        %1148 = vmatpush1.msra.mxu0 0.0
        %1149 = vmatprep.subr.mxu0 0.0
        %1150 = vmatpush1.msra.mxu0 0.0
        %1151 = vmatprep.subr.mxu0 0.0
        %1152 = vmatpush1.msra.mxu0 0.0
        %1153 = vmatprep.subr.mxu0 0.0
        %1154 = vmatpush1.msra.mxu0 0.0
        %1155 = vmatprep.subr.mxu0 0.0
        %1156 = vmatpush1.msra.mxu0 0.0
        %1157 = vmatprep.subr.mxu0 0.0
        %1158 = vmatpush1.msra.mxu0 0.0
        %1159 = vmatprep.subr.mxu0 0.0
        %1160 = vmatpush1.msra.mxu0 0.0
        %1161 = vmatprep.subr.mxu0 0.0
        %1162 = vmatpush1.msra.mxu0 0.0
        %1163 = vmatprep.subr.mxu0 0.0
        %1164 = vmatpush1.msra.mxu0 0.0
        %1165 = vmatprep.subr.mxu0 0.0
        %1166 = vmatpush1.msra.mxu0 0.0
        %1167 = vmatprep.subr.mxu0 0.0
        %1168 = vmatpush1.msra.mxu0 0.0
        %1169 = vmatprep.subr.mxu0 0.0
        %1170 = vmatpush1.msra.mxu0 0.0
        %1171 = vmatprep.subr.mxu0 0.0
        %1172 = vmatpush1.msra.mxu0 0.0
        %1173 = vmatprep.subr.mxu0 0.0
        %1174 = vmatpush1.msra.mxu0 0.0
        %1175 = vmatprep.subr.mxu0 0.0
        %1176 = vmatpush1.msra.mxu0 0.0
        %1177 = vmatprep.subr.mxu0 0.0
        %1178 = vmatpush1.msra.mxu0 0.0
        %1179 = vmatprep.subr.mxu0 0.0
        %1180 = vmatpush1.msra.mxu0 0.0
        %1181 = vmatprep.subr.mxu0 0.0
        %1182 = vmatpush1.msra.mxu0 0.0
        %1183 = vmatprep.subr.mxu0 0.0
        %1184 = vmatpush1.msra.mxu0 0.0
        %1185 = vmatprep.subr.mxu0 0.0
        %1186 = vmatpush1.msra.mxu0 0.0
        %1187 = vmatprep.subr.mxu0 0.0
        %1188 = vmatpush1.msra.mxu0 0.0
        %1189 = vmatprep.mubr.f32.mxu0 0.0
        %1190 = vmatmul.mubr.f32.gmra.mrb[0].mxu0 %v1117
        %v1191 = vpop.f32.mrb[0].mxu0
        %v1192 = vadd.f32 0.0, %v1191
        %v1193 = vpop.f32.mrb[0].mxu0
        %v1194 = vadd.f32 0.0, %v1193
        %1195 = vdwg.mxu0
        %v1196 = vadd.f32 %v1094, %v1192
        %v1197 = vadd.f32 %v1095, %v1194
        %v1198 = vld [vmem:[%s2] sm:$0xff]
        %1200 = vset.pattern.permute.xlu0 0
        %1201 = vperm.xlu0 %1200, %v1198
        %v1202 = vpop.permute.xlu0 %1201
        %v1204 = vmul.f32 %v1196, %v1202
        %v1205 = vmul.f32 %v1197, %v1202
        %v1206 = vld [vmem:[%s3] sm:$0xff]
        %1208 = vset.pattern.permute.xlu0 0
        %1209 = vperm.xlu0 %1208, %v1206
        %v1210 = vpop.permute.xlu0 %1209
        %v1212 = vadd.f32 %v1204, %v1210
        %v1213 = vadd.f32 %v1205, %v1210
        %v1214 = vmax.f32 %v1212, 0.0
        %v1215 = vmax.f32 %v1213, 0.0
        %1216 = vst [vmem:[#allocation2] sm:$0xff] 0.0
        %1217 = vst [vmem:[#allocation2 + $0x8] sm:$0xff] 0.0
        %vm1218 = vcmask 277504
        %1219 = vst.msk [vmem:[#allocation2 + $0x10] sm:$0xff] %vm1218, 0.0
        %1222 = vrot.lane.b32.xlu0 %v1214, 17
        %v1223 = vpop.permute.xlu0 %1222
        %1224 = vrot.lane.b32.xlu0 %v1215, 17
        %v1225 = vpop.permute.xlu0 %1224
        %vm1226 = vcmask 138240
        %v1227 = vsel %vm1226, %v1223, %v1225
        %vm1231 = vcmask 1047688
        %1232 = vst.msk [vmem:[#allocation2] sm:$0xff] %vm1231, %v1223
        %1233 = vst [vmem:[#allocation2 + $0x8] sm:$0xff] %v1227
        %1234 = vst.msk [vmem:[#allocation2 + $0x10] sm:$0xff] %vm1226, %v1225
        %v1235 = vld [vmem:[#allocation2] sm:$0xff]
        %v1236 = vld [vmem:[#allocation2 + $0x8] sm:$0xff]
        %v1237 = vsel %vm311, %v1235, 0.0
        %v1238 = vsel %vm312, %v1236, 0.0
        %v1239 = vld [vmem:[%s4] sm:$0xff]
        %v1240 = vld [vmem:[#allocation2 + $0x10] sm:$0xff]
        %s1241 = scalar_lea.vmem %s4, 8
        %v1242 = vld [vmem:[%s1241] sm:$0xff]
        %1246 = vrot.lane.b32.xlu0 %v1235, 127
        %v1247 = vpop.permute.xlu0 %1246
        %1248 = vrot.lane.b32.xlu0 %v1236, 127
        %v1249 = vpop.permute.xlu0 %1248
        %1250 = vrot.lane.b32.xlu0 %v1240, 127
        %v1251 = vpop.permute.xlu0 %1250
        %v1252 = vsel %vm329, %v1247, %v1249
        %v1253 = vsel %vm329, %v1249, %v1251
        %vm1256 = vcmask 64512
        %v1258 = vsel %vm1256, %v1242, 0
        %1260 = vmatprep.subr.mxu0 %v1253
        %1261 = vmatpush1.msra.mxu0 %v1252
        %1262 = vmatprep.subr.mxu0 0.0
        %1263 = vmatpush1.msra.mxu0 0.0
        %1264 = vmatprep.subr.mxu0 0.0
        %1265 = vmatpush1.msra.mxu0 0.0
        %1266 = vmatprep.subr.mxu0 0.0
        %1267 = vmatpush1.msra.mxu0 0.0
        %1268 = vmatprep.subr.mxu0 0.0
        %1269 = vmatpush1.msra.mxu0 0.0
        %1270 = vmatprep.subr.mxu0 0.0
        %1271 = vmatpush1.msra.mxu0 0.0
        %1272 = vmatprep.subr.mxu0 0.0
        %1273 = vmatpush1.msra.mxu0 0.0
        %1274 = vmatprep.subr.mxu0 0.0
        %1275 = vmatpush1.msra.mxu0 0.0
        %1276 = vmatprep.subr.mxu0 0.0
        %1277 = vmatpush1.msra.mxu0 0.0
        %1278 = vmatprep.subr.mxu0 0.0
        %1279 = vmatpush1.msra.mxu0 0.0
        %1280 = vmatprep.subr.mxu0 0.0
        %1281 = vmatpush1.msra.mxu0 0.0
        %1282 = vmatprep.subr.mxu0 0.0
        %1283 = vmatpush1.msra.mxu0 0.0
        %1284 = vmatprep.subr.mxu0 0.0
        %1285 = vmatpush1.msra.mxu0 0.0
        %1286 = vmatprep.subr.mxu0 0.0
        %1287 = vmatpush1.msra.mxu0 0.0
        %1288 = vmatprep.subr.mxu0 0.0
        %1289 = vmatpush1.msra.mxu0 0.0
        %1290 = vmatprep.subr.mxu0 0.0
        %1291 = vmatpush1.msra.mxu0 0.0
        %1292 = vmatprep.subr.mxu0 0.0
        %1293 = vmatpush1.msra.mxu0 0.0
        %1294 = vmatprep.subr.mxu0 0.0
        %1295 = vmatpush1.msra.mxu0 0.0
        %1296 = vmatprep.subr.mxu0 0.0
        %1297 = vmatpush1.msra.mxu0 0.0
        %1298 = vmatprep.subr.mxu0 0.0
        %1299 = vmatpush1.msra.mxu0 0.0
        %1300 = vmatprep.subr.mxu0 0.0
        %1301 = vmatpush1.msra.mxu0 0.0
        %1302 = vmatprep.subr.mxu0 0.0
        %1303 = vmatpush1.msra.mxu0 0.0
        %1304 = vmatprep.subr.mxu0 0.0
        %1305 = vmatpush1.msra.mxu0 0.0
        %1306 = vmatprep.subr.mxu0 0.0
        %1307 = vmatpush1.msra.mxu0 0.0
        %1308 = vmatprep.subr.mxu0 0.0
        %1309 = vmatpush1.msra.mxu0 0.0
        %1310 = vmatprep.subr.mxu0 0.0
        %1311 = vmatpush1.msra.mxu0 0.0
        %1312 = vmatprep.subr.mxu0 0.0
        %1313 = vmatpush1.msra.mxu0 0.0
        %1314 = vmatprep.subr.mxu0 0.0
        %1315 = vmatpush1.msra.mxu0 0.0
        %1316 = vmatprep.subr.mxu0 0.0
        %1317 = vmatpush1.msra.mxu0 0.0
        %1318 = vmatprep.subr.mxu0 0.0
        %1319 = vmatpush1.msra.mxu0 0.0
        %1320 = vmatprep.subr.mxu0 0.0
        %1321 = vmatpush1.msra.mxu0 0.0
        %1322 = vmatprep.subr.mxu0 0.0
        %1323 = vmatpush1.msra.mxu0 0.0
        %1324 = vmatprep.mubr.f32.mxu0 0.0
        %1325 = vmatmul.mubr.f32.gmra.mrb[0].mxu0 %v1258
        %v1326 = vpop.f32.mrb[0].mxu0
        %v1327 = vadd.f32 0.0, %v1326
        %v1328 = vpop.f32.mrb[0].mxu0
        %v1329 = vadd.f32 0.0, %v1328
        %1330 = vdwg.mxu0
        %v1332 = vsel %vm1256, %v1239, 0
        %1334 = vmatprep.subr.mxu0 %v1238
        %1335 = vmatpush1.msra.mxu0 %v1237
        %1336 = vmatprep.subr.mxu0 0.0
        %1337 = vmatpush1.msra.mxu0 0.0
        %1338 = vmatprep.subr.mxu0 0.0
        %1339 = vmatpush1.msra.mxu0 0.0
        %1340 = vmatprep.subr.mxu0 0.0
        %1341 = vmatpush1.msra.mxu0 0.0
        %1342 = vmatprep.subr.mxu0 0.0
        %1343 = vmatpush1.msra.mxu0 0.0
        %1344 = vmatprep.subr.mxu0 0.0
        %1345 = vmatpush1.msra.mxu0 0.0
        %1346 = vmatprep.subr.mxu0 0.0
        %1347 = vmatpush1.msra.mxu0 0.0
        %1348 = vmatprep.subr.mxu0 0.0
        %1349 = vmatpush1.msra.mxu0 0.0
        %1350 = vmatprep.subr.mxu0 0.0
        %1351 = vmatpush1.msra.mxu0 0.0
        %1352 = vmatprep.subr.mxu0 0.0
        %1353 = vmatpush1.msra.mxu0 0.0
        %1354 = vmatprep.subr.mxu0 0.0
        %1355 = vmatpush1.msra.mxu0 0.0
        %1356 = vmatprep.subr.mxu0 0.0
        %1357 = vmatpush1.msra.mxu0 0.0
        %1358 = vmatprep.subr.mxu0 0.0
        %1359 = vmatpush1.msra.mxu0 0.0
        %1360 = vmatprep.subr.mxu0 0.0
        %1361 = vmatpush1.msra.mxu0 0.0
        %1362 = vmatprep.subr.mxu0 0.0
        %1363 = vmatpush1.msra.mxu0 0.0
        %1364 = vmatprep.subr.mxu0 0.0
        %1365 = vmatpush1.msra.mxu0 0.0
        %1366 = vmatprep.subr.mxu0 0.0
        %1367 = vmatpush1.msra.mxu0 0.0
        %1368 = vmatprep.subr.mxu0 0.0
        %1369 = vmatpush1.msra.mxu0 0.0
        %1370 = vmatprep.subr.mxu0 0.0
        %1371 = vmatpush1.msra.mxu0 0.0
        %1372 = vmatprep.subr.mxu0 0.0
        %1373 = vmatpush1.msra.mxu0 0.0
        %1374 = vmatprep.subr.mxu0 0.0
        %1375 = vmatpush1.msra.mxu0 0.0
        %1376 = vmatprep.subr.mxu0 0.0
        %1377 = vmatpush1.msra.mxu0 0.0
        %1378 = vmatprep.subr.mxu0 0.0
        %1379 = vmatpush1.msra.mxu0 0.0
        %1380 = vmatprep.subr.mxu0 0.0
        %1381 = vmatpush1.msra.mxu0 0.0
        %1382 = vmatprep.subr.mxu0 0.0
        %1383 = vmatpush1.msra.mxu0 0.0
        %1384 = vmatprep.subr.mxu0 0.0
        %1385 = vmatpush1.msra.mxu0 0.0
        %1386 = vmatprep.subr.mxu0 0.0
        %1387 = vmatpush1.msra.mxu0 0.0
        %1388 = vmatprep.subr.mxu0 0.0
        %1389 = vmatpush1.msra.mxu0 0.0
        %1390 = vmatprep.subr.mxu0 0.0
        %1391 = vmatpush1.msra.mxu0 0.0
        %1392 = vmatprep.subr.mxu0 0.0
        %1393 = vmatpush1.msra.mxu0 0.0
        %1394 = vmatprep.subr.mxu0 0.0
        %1395 = vmatpush1.msra.mxu0 0.0
        %1396 = vmatprep.subr.mxu0 0.0
        %1397 = vmatpush1.msra.mxu0 0.0
        %1398 = vmatprep.mubr.f32.mxu0 0.0
        %1399 = vmatmul.mubr.f32.gmra.mrb[0].mxu0 %v1332
        %v1400 = vpop.f32.mrb[0].mxu0
        %v1401 = vadd.f32 %v1327, %v1400
        %v1402 = vpop.f32.mrb[0].mxu0
        %v1403 = vadd.f32 %v1329, %v1402
        %1404 = vdwg.mxu0
        %1405 = vrot.lane.b32.xlu0 %v1235, 126
        %v1406 = vpop.permute.xlu0 %1405
        %1407 = vrot.lane.b32.xlu0 %v1236, 126
        %v1408 = vpop.permute.xlu0 %1407
        %1409 = vrot.lane.b32.xlu0 %v1240, 126
        %v1410 = vpop.permute.xlu0 %1409
        %v1411 = vsel %vm507, %v1406, %v1408
        %v1412 = vsel %vm507, %v1408, %v1410
        %v1415 = vsel %vm496, %v1411, 0.0
        %v1416 = vsel %vm497, %v1412, 0.0
        %s1417 = scalar_lea.vmem %s4, 16
        %v1418 = vld [vmem:[%s1417] sm:$0xff]
        %v1420 = vsel %vm1256, %v1418, 0
        %1422 = vmatprep.subr.mxu0 %v1416
        %1423 = vmatpush1.msra.mxu0 %v1415
        %1424 = vmatprep.subr.mxu0 0.0
        %1425 = vmatpush1.msra.mxu0 0.0
        %1426 = vmatprep.subr.mxu0 0.0
        %1427 = vmatpush1.msra.mxu0 0.0
        %1428 = vmatprep.subr.mxu0 0.0
        %1429 = vmatpush1.msra.mxu0 0.0
        %1430 = vmatprep.subr.mxu0 0.0
        %1431 = vmatpush1.msra.mxu0 0.0
        %1432 = vmatprep.subr.mxu0 0.0
        %1433 = vmatpush1.msra.mxu0 0.0
        %1434 = vmatprep.subr.mxu0 0.0
        %1435 = vmatpush1.msra.mxu0 0.0
        %1436 = vmatprep.subr.mxu0 0.0
        %1437 = vmatpush1.msra.mxu0 0.0
        %1438 = vmatprep.subr.mxu0 0.0
        %1439 = vmatpush1.msra.mxu0 0.0
        %1440 = vmatprep.subr.mxu0 0.0
        %1441 = vmatpush1.msra.mxu0 0.0
        %1442 = vmatprep.subr.mxu0 0.0
        %1443 = vmatpush1.msra.mxu0 0.0
        %1444 = vmatprep.subr.mxu0 0.0
        %1445 = vmatpush1.msra.mxu0 0.0
        %1446 = vmatprep.subr.mxu0 0.0
        %1447 = vmatpush1.msra.mxu0 0.0
        %1448 = vmatprep.subr.mxu0 0.0
        %1449 = vmatpush1.msra.mxu0 0.0
        %1450 = vmatprep.subr.mxu0 0.0
        %1451 = vmatpush1.msra.mxu0 0.0
        %1452 = vmatprep.subr.mxu0 0.0
        %1453 = vmatpush1.msra.mxu0 0.0
        %1454 = vmatprep.subr.mxu0 0.0
        %1455 = vmatpush1.msra.mxu0 0.0
        %1456 = vmatprep.subr.mxu0 0.0
        %1457 = vmatpush1.msra.mxu0 0.0
        %1458 = vmatprep.subr.mxu0 0.0
        %1459 = vmatpush1.msra.mxu0 0.0
        %1460 = vmatprep.subr.mxu0 0.0
        %1461 = vmatpush1.msra.mxu0 0.0
        %1462 = vmatprep.subr.mxu0 0.0
        %1463 = vmatpush1.msra.mxu0 0.0
        %1464 = vmatprep.subr.mxu0 0.0
        %1465 = vmatpush1.msra.mxu0 0.0
        %1466 = vmatprep.subr.mxu0 0.0
        %1467 = vmatpush1.msra.mxu0 0.0
        %1468 = vmatprep.subr.mxu0 0.0
        %1469 = vmatpush1.msra.mxu0 0.0
        %1470 = vmatprep.subr.mxu0 0.0
        %1471 = vmatpush1.msra.mxu0 0.0
        %1472 = vmatprep.subr.mxu0 0.0
        %1473 = vmatpush1.msra.mxu0 0.0
        %1474 = vmatprep.subr.mxu0 0.0
        %1475 = vmatpush1.msra.mxu0 0.0
        %1476 = vmatprep.subr.mxu0 0.0
        %1477 = vmatpush1.msra.mxu0 0.0
        %1478 = vmatprep.subr.mxu0 0.0
        %1479 = vmatpush1.msra.mxu0 0.0
        %1480 = vmatprep.subr.mxu0 0.0
        %1481 = vmatpush1.msra.mxu0 0.0
        %1482 = vmatprep.subr.mxu0 0.0
        %1483 = vmatpush1.msra.mxu0 0.0
        %1484 = vmatprep.subr.mxu0 0.0
        %1485 = vmatpush1.msra.mxu0 0.0
        %1486 = vmatprep.mubr.f32.mxu0 0.0
        %1487 = vmatmul.mubr.f32.gmra.mrb[0].mxu0 %v1420
        %v1488 = vpop.f32.mrb[0].mxu0
        %v1489 = vadd.f32 0.0, %v1488
        %v1490 = vpop.f32.mrb[0].mxu0
        %v1491 = vadd.f32 0.0, %v1490
        %1492 = vdwg.mxu0
        %v1493 = vadd.f32 %v1401, %v1489
        %v1494 = vadd.f32 %v1403, %v1491
        %1495 = vrot.lane.b32.xlu0 %v1235, 112
        %v1496 = vpop.permute.xlu0 %1495
        %1497 = vrot.lane.b32.xlu0 %v1236, 112
        %v1498 = vpop.permute.xlu0 %1497
        %1499 = vrot.lane.b32.xlu0 %v1240, 112
        %v1500 = vpop.permute.xlu0 %1499
        %v1501 = vsel %vm609, %v1496, %v1498
        %v1502 = vsel %vm609, %v1498, %v1500
        %v1505 = vsel %vm311, %v1501, 0.0
        %v1506 = vsel %vm312, %v1502, 0.0
        %s1507 = scalar_lea.vmem %s4, 24
        %v1508 = vld [vmem:[%s1507] sm:$0xff]
        %v1510 = vsel %vm1256, %v1508, 0
        %1512 = vmatprep.subr.mxu0 %v1506
        %1513 = vmatpush1.msra.mxu0 %v1505
        %1514 = vmatprep.subr.mxu0 0.0
        %1515 = vmatpush1.msra.mxu0 0.0
        %1516 = vmatprep.subr.mxu0 0.0
        %1517 = vmatpush1.msra.mxu0 0.0
        %1518 = vmatprep.subr.mxu0 0.0
        %1519 = vmatpush1.msra.mxu0 0.0
        %1520 = vmatprep.subr.mxu0 0.0
        %1521 = vmatpush1.msra.mxu0 0.0
        %1522 = vmatprep.subr.mxu0 0.0
        %1523 = vmatpush1.msra.mxu0 0.0
        %1524 = vmatprep.subr.mxu0 0.0
        %1525 = vmatpush1.msra.mxu0 0.0
        %1526 = vmatprep.subr.mxu0 0.0
        %1527 = vmatpush1.msra.mxu0 0.0
        %1528 = vmatprep.subr.mxu0 0.0
        %1529 = vmatpush1.msra.mxu0 0.0
        %1530 = vmatprep.subr.mxu0 0.0
        %1531 = vmatpush1.msra.mxu0 0.0
        %1532 = vmatprep.subr.mxu0 0.0
        %1533 = vmatpush1.msra.mxu0 0.0
        %1534 = vmatprep.subr.mxu0 0.0
        %1535 = vmatpush1.msra.mxu0 0.0
        %1536 = vmatprep.subr.mxu0 0.0
        %1537 = vmatpush1.msra.mxu0 0.0
        %1538 = vmatprep.subr.mxu0 0.0
        %1539 = vmatpush1.msra.mxu0 0.0
        %1540 = vmatprep.subr.mxu0 0.0
        %1541 = vmatpush1.msra.mxu0 0.0
        %1542 = vmatprep.subr.mxu0 0.0
        %1543 = vmatpush1.msra.mxu0 0.0
        %1544 = vmatprep.subr.mxu0 0.0
        %1545 = vmatpush1.msra.mxu0 0.0
        %1546 = vmatprep.subr.mxu0 0.0
        %1547 = vmatpush1.msra.mxu0 0.0
        %1548 = vmatprep.subr.mxu0 0.0
        %1549 = vmatpush1.msra.mxu0 0.0
        %1550 = vmatprep.subr.mxu0 0.0
        %1551 = vmatpush1.msra.mxu0 0.0
        %1552 = vmatprep.subr.mxu0 0.0
        %1553 = vmatpush1.msra.mxu0 0.0
        %1554 = vmatprep.subr.mxu0 0.0
        %1555 = vmatpush1.msra.mxu0 0.0
        %1556 = vmatprep.subr.mxu0 0.0
        %1557 = vmatpush1.msra.mxu0 0.0
        %1558 = vmatprep.subr.mxu0 0.0
        %1559 = vmatpush1.msra.mxu0 0.0
        %1560 = vmatprep.subr.mxu0 0.0
        %1561 = vmatpush1.msra.mxu0 0.0
        %1562 = vmatprep.subr.mxu0 0.0
        %1563 = vmatpush1.msra.mxu0 0.0
        %1564 = vmatprep.subr.mxu0 0.0
        %1565 = vmatpush1.msra.mxu0 0.0
        %1566 = vmatprep.subr.mxu0 0.0
        %1567 = vmatpush1.msra.mxu0 0.0
        %1568 = vmatprep.subr.mxu0 0.0
        %1569 = vmatpush1.msra.mxu0 0.0
        %1570 = vmatprep.subr.mxu0 0.0
        %1571 = vmatpush1.msra.mxu0 0.0
        %1572 = vmatprep.subr.mxu0 0.0
        %1573 = vmatpush1.msra.mxu0 0.0
        %1574 = vmatprep.subr.mxu0 0.0
        %1575 = vmatpush1.msra.mxu0 0.0
        %1576 = vmatprep.mubr.f32.mxu0 0.0
        %1577 = vmatmul.mubr.f32.gmra.mrb[0].mxu0 %v1510
        %v1578 = vpop.f32.mrb[0].mxu0
        %v1579 = vadd.f32 0.0, %v1578
        %v1580 = vpop.f32.mrb[0].mxu0
        %v1581 = vadd.f32 0.0, %v1580
        %1582 = vdwg.mxu0
        %v1583 = vadd.f32 %v1493, %v1579
        %v1584 = vadd.f32 %v1494, %v1581
        %s1585 = scalar_lea.vmem %s4, 32
        %v1586 = vld [vmem:[%s1585] sm:$0xff]
        %1587 = vrot.lane.b32.xlu0 %v1235, 111
        %v1588 = vpop.permute.xlu0 %1587
        %1589 = vrot.lane.b32.xlu0 %v1236, 111
        %v1590 = vpop.permute.xlu0 %1589
        %1591 = vrot.lane.b32.xlu0 %v1240, 111
        %v1592 = vpop.permute.xlu0 %1591
        %v1593 = vsel %vm713, %v1588, %v1590
        %v1594 = vsel %vm713, %v1590, %v1592
        %v1598 = vsel %vm1256, %v1586, 0
        %1600 = vmatprep.subr.mxu0 %v1594
        %1601 = vmatpush1.msra.mxu0 %v1593
        %1602 = vmatprep.subr.mxu0 0.0
        %1603 = vmatpush1.msra.mxu0 0.0
        %1604 = vmatprep.subr.mxu0 0.0
        %1605 = vmatpush1.msra.mxu0 0.0
        %1606 = vmatprep.subr.mxu0 0.0
        %1607 = vmatpush1.msra.mxu0 0.0
        %1608 = vmatprep.subr.mxu0 0.0
        %1609 = vmatpush1.msra.mxu0 0.0
        %1610 = vmatprep.subr.mxu0 0.0
        %1611 = vmatpush1.msra.mxu0 0.0
        %1612 = vmatprep.subr.mxu0 0.0
        %1613 = vmatpush1.msra.mxu0 0.0
        %1614 = vmatprep.subr.mxu0 0.0
        %1615 = vmatpush1.msra.mxu0 0.0
        %1616 = vmatprep.subr.mxu0 0.0
        %1617 = vmatpush1.msra.mxu0 0.0
        %1618 = vmatprep.subr.mxu0 0.0
        %1619 = vmatpush1.msra.mxu0 0.0
        %1620 = vmatprep.subr.mxu0 0.0
        %1621 = vmatpush1.msra.mxu0 0.0
        %1622 = vmatprep.subr.mxu0 0.0
        %1623 = vmatpush1.msra.mxu0 0.0
        %1624 = vmatprep.subr.mxu0 0.0
        %1625 = vmatpush1.msra.mxu0 0.0
        %1626 = vmatprep.subr.mxu0 0.0
        %1627 = vmatpush1.msra.mxu0 0.0
        %1628 = vmatprep.subr.mxu0 0.0
        %1629 = vmatpush1.msra.mxu0 0.0
        %1630 = vmatprep.subr.mxu0 0.0
        %1631 = vmatpush1.msra.mxu0 0.0
        %1632 = vmatprep.subr.mxu0 0.0
        %1633 = vmatpush1.msra.mxu0 0.0
        %1634 = vmatprep.subr.mxu0 0.0
        %1635 = vmatpush1.msra.mxu0 0.0
        %1636 = vmatprep.subr.mxu0 0.0
        %1637 = vmatpush1.msra.mxu0 0.0
        %1638 = vmatprep.subr.mxu0 0.0
        %1639 = vmatpush1.msra.mxu0 0.0
        %1640 = vmatprep.subr.mxu0 0.0
        %1641 = vmatpush1.msra.mxu0 0.0
        %1642 = vmatprep.subr.mxu0 0.0
        %1643 = vmatpush1.msra.mxu0 0.0
        %1644 = vmatprep.subr.mxu0 0.0
        %1645 = vmatpush1.msra.mxu0 0.0
        %1646 = vmatprep.subr.mxu0 0.0
        %1647 = vmatpush1.msra.mxu0 0.0
        %1648 = vmatprep.subr.mxu0 0.0
        %1649 = vmatpush1.msra.mxu0 0.0
        %1650 = vmatprep.subr.mxu0 0.0
        %1651 = vmatpush1.msra.mxu0 0.0
        %1652 = vmatprep.subr.mxu0 0.0
        %1653 = vmatpush1.msra.mxu0 0.0
        %1654 = vmatprep.subr.mxu0 0.0
        %1655 = vmatpush1.msra.mxu0 0.0
        %1656 = vmatprep.subr.mxu0 0.0
        %1657 = vmatpush1.msra.mxu0 0.0
        %1658 = vmatprep.subr.mxu0 0.0
        %1659 = vmatpush1.msra.mxu0 0.0
        %1660 = vmatprep.subr.mxu0 0.0
        %1661 = vmatpush1.msra.mxu0 0.0
        %1662 = vmatprep.subr.mxu0 0.0
        %1663 = vmatpush1.msra.mxu0 0.0
        %1664 = vmatprep.mubr.f32.mxu0 0.0
        %1665 = vmatmul.mubr.f32.gmra.mrb[0].mxu0 %v1598
        %v1666 = vpop.f32.mrb[0].mxu0
        %v1667 = vadd.f32 0.0, %v1666
        %v1668 = vpop.f32.mrb[0].mxu0
        %v1669 = vadd.f32 0.0, %v1668
        %1670 = vdwg.mxu0
        %v1671 = vadd.f32 %v1583, %v1667
        %v1672 = vadd.f32 %v1584, %v1669
        %1673 = vrot.lane.b32.xlu0 %v1235, 110
        %v1674 = vpop.permute.xlu0 %1673
        %1675 = vrot.lane.b32.xlu0 %v1236, 110
        %v1676 = vpop.permute.xlu0 %1675
        %1677 = vrot.lane.b32.xlu0 %v1240, 110
        %v1678 = vpop.permute.xlu0 %1677
        %v1679 = vsel %vm807, %v1674, %v1676
        %v1680 = vsel %vm807, %v1676, %v1678
        %v1683 = vsel %vm496, %v1679, 0.0
        %v1684 = vsel %vm497, %v1680, 0.0
        %s1685 = scalar_lea.vmem %s4, 40
        %v1686 = vld [vmem:[%s1685] sm:$0xff]
        %v1688 = vsel %vm1256, %v1686, 0
        %1690 = vmatprep.subr.mxu0 %v1684
        %1691 = vmatpush1.msra.mxu0 %v1683
        %1692 = vmatprep.subr.mxu0 0.0
        %1693 = vmatpush1.msra.mxu0 0.0
        %1694 = vmatprep.subr.mxu0 0.0
        %1695 = vmatpush1.msra.mxu0 0.0
        %1696 = vmatprep.subr.mxu0 0.0
        %1697 = vmatpush1.msra.mxu0 0.0
        %1698 = vmatprep.subr.mxu0 0.0
        %1699 = vmatpush1.msra.mxu0 0.0
        %1700 = vmatprep.subr.mxu0 0.0
        %1701 = vmatpush1.msra.mxu0 0.0
        %1702 = vmatprep.subr.mxu0 0.0
        %1703 = vmatpush1.msra.mxu0 0.0
        %1704 = vmatprep.subr.mxu0 0.0
        %1705 = vmatpush1.msra.mxu0 0.0
        %1706 = vmatprep.subr.mxu0 0.0
        %1707 = vmatpush1.msra.mxu0 0.0
        %1708 = vmatprep.subr.mxu0 0.0
        %1709 = vmatpush1.msra.mxu0 0.0
        %1710 = vmatprep.subr.mxu0 0.0
        %1711 = vmatpush1.msra.mxu0 0.0
        %1712 = vmatprep.subr.mxu0 0.0
        %1713 = vmatpush1.msra.mxu0 0.0
        %1714 = vmatprep.subr.mxu0 0.0
        %1715 = vmatpush1.msra.mxu0 0.0
        %1716 = vmatprep.subr.mxu0 0.0
        %1717 = vmatpush1.msra.mxu0 0.0
        %1718 = vmatprep.subr.mxu0 0.0
        %1719 = vmatpush1.msra.mxu0 0.0
        %1720 = vmatprep.subr.mxu0 0.0
        %1721 = vmatpush1.msra.mxu0 0.0
        %1722 = vmatprep.subr.mxu0 0.0
        %1723 = vmatpush1.msra.mxu0 0.0
        %1724 = vmatprep.subr.mxu0 0.0
        %1725 = vmatpush1.msra.mxu0 0.0
        %1726 = vmatprep.subr.mxu0 0.0
        %1727 = vmatpush1.msra.mxu0 0.0
        %1728 = vmatprep.subr.mxu0 0.0
        %1729 = vmatpush1.msra.mxu0 0.0
        %1730 = vmatprep.subr.mxu0 0.0
        %1731 = vmatpush1.msra.mxu0 0.0
        %1732 = vmatprep.subr.mxu0 0.0
        %1733 = vmatpush1.msra.mxu0 0.0
        %1734 = vmatprep.subr.mxu0 0.0
        %1735 = vmatpush1.msra.mxu0 0.0
        %1736 = vmatprep.subr.mxu0 0.0
        %1737 = vmatpush1.msra.mxu0 0.0
        %1738 = vmatprep.subr.mxu0 0.0
        %1739 = vmatpush1.msra.mxu0 0.0
        %1740 = vmatprep.subr.mxu0 0.0
        %1741 = vmatpush1.msra.mxu0 0.0
        %1742 = vmatprep.subr.mxu0 0.0
        %1743 = vmatpush1.msra.mxu0 0.0
        %1744 = vmatprep.subr.mxu0 0.0
        %1745 = vmatpush1.msra.mxu0 0.0
        %1746 = vmatprep.subr.mxu0 0.0
        %1747 = vmatpush1.msra.mxu0 0.0
        %1748 = vmatprep.subr.mxu0 0.0
        %1749 = vmatpush1.msra.mxu0 0.0
        %1750 = vmatprep.subr.mxu0 0.0
        %1751 = vmatpush1.msra.mxu0 0.0
        %1752 = vmatprep.subr.mxu0 0.0
        %1753 = vmatpush1.msra.mxu0 0.0
        %1754 = vmatprep.mubr.f32.mxu0 0.0
        %1755 = vmatmul.mubr.f32.gmra.mrb[0].mxu0 %v1688
        %v1756 = vpop.f32.mrb[0].mxu0
        %v1757 = vadd.f32 0.0, %v1756
        %v1758 = vpop.f32.mrb[0].mxu0
        %v1759 = vadd.f32 0.0, %v1758
        %1760 = vdwg.mxu0
        %v1761 = vadd.f32 %v1671, %v1757
        %v1762 = vadd.f32 %v1672, %v1759
        %1763 = vrot.lane.b32.xlu0 %v1235, 96
        %v1764 = vpop.permute.xlu0 %1763
        %1765 = vrot.lane.b32.xlu0 %v1236, 96
        %v1766 = vpop.permute.xlu0 %1765
        %1767 = vrot.lane.b32.xlu0 %v1240, 96
        %v1768 = vpop.permute.xlu0 %1767
        %v1769 = vsel %vm909, %v1764, %v1766
        %v1770 = vsel %vm909, %v1766, %v1768
        %v1773 = vsel %vm311, %v1769, 0.0
        %v1774 = vsel %vm312, %v1770, 0.0
        %s1775 = scalar_lea.vmem %s4, 48
        %v1776 = vld [vmem:[%s1775] sm:$0xff]
        %v1778 = vsel %vm1256, %v1776, 0
        %1780 = vmatprep.subr.mxu0 %v1774
        %1781 = vmatpush1.msra.mxu0 %v1773
        %1782 = vmatprep.subr.mxu0 0.0
        %1783 = vmatpush1.msra.mxu0 0.0
        %1784 = vmatprep.subr.mxu0 0.0
        %1785 = vmatpush1.msra.mxu0 0.0
        %1786 = vmatprep.subr.mxu0 0.0
        %1787 = vmatpush1.msra.mxu0 0.0
        %1788 = vmatprep.subr.mxu0 0.0
        %1789 = vmatpush1.msra.mxu0 0.0
        %1790 = vmatprep.subr.mxu0 0.0
        %1791 = vmatpush1.msra.mxu0 0.0
        %1792 = vmatprep.subr.mxu0 0.0
        %1793 = vmatpush1.msra.mxu0 0.0
        %1794 = vmatprep.subr.mxu0 0.0
        %1795 = vmatpush1.msra.mxu0 0.0
        %1796 = vmatprep.subr.mxu0 0.0
        %1797 = vmatpush1.msra.mxu0 0.0
        %1798 = vmatprep.subr.mxu0 0.0
        %1799 = vmatpush1.msra.mxu0 0.0
        %1800 = vmatprep.subr.mxu0 0.0
        %1801 = vmatpush1.msra.mxu0 0.0
        %1802 = vmatprep.subr.mxu0 0.0
        %1803 = vmatpush1.msra.mxu0 0.0
        %1804 = vmatprep.subr.mxu0 0.0
        %1805 = vmatpush1.msra.mxu0 0.0
        %1806 = vmatprep.subr.mxu0 0.0
        %1807 = vmatpush1.msra.mxu0 0.0
        %1808 = vmatprep.subr.mxu0 0.0
        %1809 = vmatpush1.msra.mxu0 0.0
        %1810 = vmatprep.subr.mxu0 0.0
        %1811 = vmatpush1.msra.mxu0 0.0
        %1812 = vmatprep.subr.mxu0 0.0
        %1813 = vmatpush1.msra.mxu0 0.0
        %1814 = vmatprep.subr.mxu0 0.0
        %1815 = vmatpush1.msra.mxu0 0.0
        %1816 = vmatprep.subr.mxu0 0.0
        %1817 = vmatpush1.msra.mxu0 0.0
        %1818 = vmatprep.subr.mxu0 0.0
        %1819 = vmatpush1.msra.mxu0 0.0
        %1820 = vmatprep.subr.mxu0 0.0
        %1821 = vmatpush1.msra.mxu0 0.0
        %1822 = vmatprep.subr.mxu0 0.0
        %1823 = vmatpush1.msra.mxu0 0.0
        %1824 = vmatprep.subr.mxu0 0.0
        %1825 = vmatpush1.msra.mxu0 0.0
        %1826 = vmatprep.subr.mxu0 0.0
        %1827 = vmatpush1.msra.mxu0 0.0
        %1828 = vmatprep.subr.mxu0 0.0
        %1829 = vmatpush1.msra.mxu0 0.0
        %1830 = vmatprep.subr.mxu0 0.0
        %1831 = vmatpush1.msra.mxu0 0.0
        %1832 = vmatprep.subr.mxu0 0.0
        %1833 = vmatpush1.msra.mxu0 0.0
        %1834 = vmatprep.subr.mxu0 0.0
        %1835 = vmatpush1.msra.mxu0 0.0
        %1836 = vmatprep.subr.mxu0 0.0
        %1837 = vmatpush1.msra.mxu0 0.0
        %1838 = vmatprep.subr.mxu0 0.0
        %1839 = vmatpush1.msra.mxu0 0.0
        %1840 = vmatprep.subr.mxu0 0.0
        %1841 = vmatpush1.msra.mxu0 0.0
        %1842 = vmatprep.subr.mxu0 0.0
        %1843 = vmatpush1.msra.mxu0 0.0
        %1844 = vmatprep.mubr.f32.mxu0 0.0
        %1845 = vmatmul.mubr.f32.gmra.mrb[0].mxu0 %v1778
        %v1846 = vpop.f32.mrb[0].mxu0
        %v1847 = vadd.f32 0.0, %v1846
        %v1848 = vpop.f32.mrb[0].mxu0
        %v1849 = vadd.f32 0.0, %v1848
        %1850 = vdwg.mxu0
        %v1851 = vadd.f32 %v1761, %v1847
        %v1852 = vadd.f32 %v1762, %v1849
        %s1853 = scalar_lea.vmem %s4, 56
        %v1854 = vld [vmem:[%s1853] sm:$0xff]
        %1855 = vrot.lane.b32.xlu0 %v1235, 95
        %v1856 = vpop.permute.xlu0 %1855
        %1857 = vrot.lane.b32.xlu0 %v1236, 95
        %v1858 = vpop.permute.xlu0 %1857
        %1859 = vrot.lane.b32.xlu0 %v1240, 95
        %v1860 = vpop.permute.xlu0 %1859
        %v1861 = vsel %vm1013, %v1856, %v1858
        %v1862 = vsel %vm1013, %v1858, %v1860
        %v1866 = vsel %vm1256, %v1854, 0
        %1868 = vmatprep.subr.mxu0 %v1862
        %1869 = vmatpush1.msra.mxu0 %v1861
        %1870 = vmatprep.subr.mxu0 0.0
        %1871 = vmatpush1.msra.mxu0 0.0
        %1872 = vmatprep.subr.mxu0 0.0
        %1873 = vmatpush1.msra.mxu0 0.0
        %1874 = vmatprep.subr.mxu0 0.0
        %1875 = vmatpush1.msra.mxu0 0.0
        %1876 = vmatprep.subr.mxu0 0.0
        %1877 = vmatpush1.msra.mxu0 0.0
        %1878 = vmatprep.subr.mxu0 0.0
        %1879 = vmatpush1.msra.mxu0 0.0
        %1880 = vmatprep.subr.mxu0 0.0
        %1881 = vmatpush1.msra.mxu0 0.0
        %1882 = vmatprep.subr.mxu0 0.0
        %1883 = vmatpush1.msra.mxu0 0.0
        %1884 = vmatprep.subr.mxu0 0.0
        %1885 = vmatpush1.msra.mxu0 0.0
        %1886 = vmatprep.subr.mxu0 0.0
        %1887 = vmatpush1.msra.mxu0 0.0
        %1888 = vmatprep.subr.mxu0 0.0
        %1889 = vmatpush1.msra.mxu0 0.0
        %1890 = vmatprep.subr.mxu0 0.0
        %1891 = vmatpush1.msra.mxu0 0.0
        %1892 = vmatprep.subr.mxu0 0.0
        %1893 = vmatpush1.msra.mxu0 0.0
        %1894 = vmatprep.subr.mxu0 0.0
        %1895 = vmatpush1.msra.mxu0 0.0
        %1896 = vmatprep.subr.mxu0 0.0
        %1897 = vmatpush1.msra.mxu0 0.0
        %1898 = vmatprep.subr.mxu0 0.0
        %1899 = vmatpush1.msra.mxu0 0.0
        %1900 = vmatprep.subr.mxu0 0.0
        %1901 = vmatpush1.msra.mxu0 0.0
        %1902 = vmatprep.subr.mxu0 0.0
        %1903 = vmatpush1.msra.mxu0 0.0
        %1904 = vmatprep.subr.mxu0 0.0
        %1905 = vmatpush1.msra.mxu0 0.0
        %1906 = vmatprep.subr.mxu0 0.0
        %1907 = vmatpush1.msra.mxu0 0.0
        %1908 = vmatprep.subr.mxu0 0.0
        %1909 = vmatpush1.msra.mxu0 0.0
        %1910 = vmatprep.subr.mxu0 0.0
        %1911 = vmatpush1.msra.mxu0 0.0
        %1912 = vmatprep.subr.mxu0 0.0
        %1913 = vmatpush1.msra.mxu0 0.0
        %1914 = vmatprep.subr.mxu0 0.0
        %1915 = vmatpush1.msra.mxu0 0.0
        %1916 = vmatprep.subr.mxu0 0.0
        %1917 = vmatpush1.msra.mxu0 0.0
        %1918 = vmatprep.subr.mxu0 0.0
        %1919 = vmatpush1.msra.mxu0 0.0
        %1920 = vmatprep.subr.mxu0 0.0
        %1921 = vmatpush1.msra.mxu0 0.0
        %1922 = vmatprep.subr.mxu0 0.0
        %1923 = vmatpush1.msra.mxu0 0.0
        %1924 = vmatprep.subr.mxu0 0.0
        %1925 = vmatpush1.msra.mxu0 0.0
        %1926 = vmatprep.subr.mxu0 0.0
        %1927 = vmatpush1.msra.mxu0 0.0
        %1928 = vmatprep.subr.mxu0 0.0
        %1929 = vmatpush1.msra.mxu0 0.0
        %1930 = vmatprep.subr.mxu0 0.0
        %1931 = vmatpush1.msra.mxu0 0.0
        %1932 = vmatprep.mubr.f32.mxu0 0.0
        %1933 = vmatmul.mubr.f32.gmra.mrb[0].mxu0 %v1866
        %v1934 = vpop.f32.mrb[0].mxu0
        %v1935 = vadd.f32 0.0, %v1934
        %v1936 = vpop.f32.mrb[0].mxu0
        %v1937 = vadd.f32 0.0, %v1936
        %1938 = vdwg.mxu0
        %v1939 = vadd.f32 %v1851, %v1935
        %v1940 = vadd.f32 %v1852, %v1937
        %1941 = vrot.lane.b32.xlu0 %v1235, 94
        %v1942 = vpop.permute.xlu0 %1941
        %1943 = vrot.lane.b32.xlu0 %v1236, 94
        %v1944 = vpop.permute.xlu0 %1943
        %1945 = vrot.lane.b32.xlu0 %v1240, 94
        %v1946 = vpop.permute.xlu0 %1945
        %v1947 = vsel %vm1107, %v1942, %v1944
        %v1948 = vsel %vm1107, %v1944, %v1946
        %v1951 = vsel %vm496, %v1947, 0.0
        %v1952 = vsel %vm497, %v1948, 0.0
        %s1953 = scalar_lea.vmem %s4, 64
        %v1954 = vld [vmem:[%s1953] sm:$0xff]
        %v1956 = vsel %vm1256, %v1954, 0
        %1958 = vmatprep.subr.mxu0 %v1952
        %1959 = vmatpush1.msra.mxu0 %v1951
        %1960 = vmatprep.subr.mxu0 0.0
        %1961 = vmatpush1.msra.mxu0 0.0
        %1962 = vmatprep.subr.mxu0 0.0
        %1963 = vmatpush1.msra.mxu0 0.0
        %1964 = vmatprep.subr.mxu0 0.0
        %1965 = vmatpush1.msra.mxu0 0.0
        %1966 = vmatprep.subr.mxu0 0.0
        %1967 = vmatpush1.msra.mxu0 0.0
        %1968 = vmatprep.subr.mxu0 0.0
        %1969 = vmatpush1.msra.mxu0 0.0
        %1970 = vmatprep.subr.mxu0 0.0
        %1971 = vmatpush1.msra.mxu0 0.0
        %1972 = vmatprep.subr.mxu0 0.0
        %1973 = vmatpush1.msra.mxu0 0.0
        %1974 = vmatprep.subr.mxu0 0.0
        %1975 = vmatpush1.msra.mxu0 0.0
        %1976 = vmatprep.subr.mxu0 0.0
        %1977 = vmatpush1.msra.mxu0 0.0
        %1978 = vmatprep.subr.mxu0 0.0
        %1979 = vmatpush1.msra.mxu0 0.0
        %1980 = vmatprep.subr.mxu0 0.0
        %1981 = vmatpush1.msra.mxu0 0.0
        %1982 = vmatprep.subr.mxu0 0.0
        %1983 = vmatpush1.msra.mxu0 0.0
        %1984 = vmatprep.subr.mxu0 0.0
        %1985 = vmatpush1.msra.mxu0 0.0
        %1986 = vmatprep.subr.mxu0 0.0
        %1987 = vmatpush1.msra.mxu0 0.0
        %1988 = vmatprep.subr.mxu0 0.0
        %1989 = vmatpush1.msra.mxu0 0.0
        %1990 = vmatprep.subr.mxu0 0.0
        %1991 = vmatpush1.msra.mxu0 0.0
        %1992 = vmatprep.subr.mxu0 0.0
        %1993 = vmatpush1.msra.mxu0 0.0
        %1994 = vmatprep.subr.mxu0 0.0
        %1995 = vmatpush1.msra.mxu0 0.0
        %1996 = vmatprep.subr.mxu0 0.0
        %1997 = vmatpush1.msra.mxu0 0.0
        %1998 = vmatprep.subr.mxu0 0.0
        %1999 = vmatpush1.msra.mxu0 0.0
        %2000 = vmatprep.subr.mxu0 0.0
        %2001 = vmatpush1.msra.mxu0 0.0
        %2002 = vmatprep.subr.mxu0 0.0
        %2003 = vmatpush1.msra.mxu0 0.0
        %2004 = vmatprep.subr.mxu0 0.0
        %2005 = vmatpush1.msra.mxu0 0.0
        %2006 = vmatprep.subr.mxu0 0.0
        %2007 = vmatpush1.msra.mxu0 0.0
        %2008 = vmatprep.subr.mxu0 0.0
        %2009 = vmatpush1.msra.mxu0 0.0
        %2010 = vmatprep.subr.mxu0 0.0
        %2011 = vmatpush1.msra.mxu0 0.0
        %2012 = vmatprep.subr.mxu0 0.0
        %2013 = vmatpush1.msra.mxu0 0.0
        %2014 = vmatprep.subr.mxu0 0.0
        %2015 = vmatpush1.msra.mxu0 0.0
        %2016 = vmatprep.subr.mxu0 0.0
        %2017 = vmatpush1.msra.mxu0 0.0
        %2018 = vmatprep.subr.mxu0 0.0
        %2019 = vmatpush1.msra.mxu0 0.0
        %2020 = vmatprep.subr.mxu0 0.0
        %2021 = vmatpush1.msra.mxu0 0.0
        %2022 = vmatprep.mubr.f32.mxu0 0.0
        %2023 = vmatmul.mubr.f32.gmra.mrb[0].mxu0 %v1956
        %v2024 = vpop.f32.mrb[0].mxu0
        %v2025 = vadd.f32 0.0, %v2024
        %v2026 = vpop.f32.mrb[0].mxu0
        %v2027 = vadd.f32 0.0, %v2026
        %2028 = vdwg.mxu0
        %v2029 = vadd.f32 %v1939, %v2025
        %v2030 = vadd.f32 %v1940, %v2027
        %v2031 = vld [vmem:[%s5] sm:$0xff]
        %2033 = vset.pattern.permute.xlu0 0
        %2034 = vperm.xlu0 %2033, %v2031
        %v2035 = vpop.permute.xlu0 %2034
        %v2037 = vmul.f32 %v2029, %v2035
        %v2038 = vmul.f32 %v2030, %v2035
        %v2039 = vld [vmem:[%s6] sm:$0xff]
        %2041 = vset.pattern.permute.xlu0 0
        %2042 = vperm.xlu0 %2041, %v2039
        %v2043 = vpop.permute.xlu0 %2042
        %v2045 = vadd.f32 %v2037, %v2043
        %v2046 = vadd.f32 %v2038, %v2043
        %v2047 = vmax.f32 %v2045, 0.0
        %v2048 = vmax.f32 %v2046, 0.0
        %2049 = vst [vmem:[%s271] sm:$0xff] %v2047
        %2050 = vst [vmem:[%s271 + $0x8] sm:$0xff] %v2048
        %s2051 = sand.u32 %s181, 1
        %s2052 = scalar_lea.sflag [#allocation4], %s2051
        %s2053 = sand.u32 %s181, 1
        %s2054 = smul.addr %s2053, 16
        %s2055 = scalar_lea.vmem [#allocation3], %s2054
        // Predicated region
        $region49: #{tpu_custom_call.1} parent=47 // pred_check
          %p2056 = pneg %p191
        $region50: #{tpu_custom_call.1} parent=47 // pred_check_branch
          %2058 = sbr.rel (%p2056) target = $region52
        $region51: #{tpu_custom_call.1} parent=47 // pred_region
          %s2060 = ssub.s32 256, 256
          %2061 = vsyncadd %s2052, %s2060
          %s2062 = smul.addr %s21, 2
          %s2063 = smul.addr %s2062, 128
          %s2064 = scalar_lea.hbm %s7, %s2063
          %s2066 = sshll.u32 %s2055, 4
          %s2067 = int_to_ptr.vmem [resolvable:$true] %s2066
          %2069 = dma.vmem_to_hbm [thread:$0]  %s2067, 256, %s2064, %s2052
        $region52: #{tpu_custom_call.1} parent=47 // pred_fallthru
          _
      $region48: #{tpu_custom_call.1} parent=5 // pred_fallthru
        _
      %p2070 = scmp.le.s32.totalorder 2, %s16
      // Predicated region
      $region53: #{tpu_custom_call.1} parent=5 // pred_check
        %p2071 = pneg %p2070
      $region54: #{tpu_custom_call.1} parent=5 // pred_check_branch
        %2073 = sbr.rel (%p2071) target = $region56
      $region55: #{tpu_custom_call.1} parent=5 // pred_region
        %s2074 = ssub.s32 %s16, 2
        // Predicated region
        $region57: #{tpu_custom_call.1} parent=55 // pred_check
          %p2075 = pneg %p197
        $region58: #{tpu_custom_call.1} parent=55 // pred_check_branch
          %2077 = sbr.rel (%p2075) target = $region60
        $region59: #{tpu_custom_call.1} parent=55 // pred_region
          %s2078 = sand.u32 %s182, 1
          %s2079 = scalar_lea.sflag [#allocation4], %s2078
          %s2080 = sand.u32 %s182, 1
          %s2081 = smul.addr %s2080, 16
          %s2082 = scalar_lea.vmem [#allocation3], %s2081
          %2083 = dma.done %s2079, 256
        $region60: #{tpu_custom_call.1} parent=55 // pred_fallthru
          _
      $region56: #{tpu_custom_call.1} parent=5 // pred_fallthru
        _
    $region6: #{tpu_custom_call.1} parent=1 // loop_footer
      %s20 = sadd.s32 1, %s16
    $region7: #{tpu_custom_call.1} parent=1 // loop_footer_branch
      %15 = sbr.rel target = $region3
    $region8: #{tpu_custom_call.1} parent=1 // loop_exit
      _
    %2084 = vsyncpa [#allocation4], 1
    %s2085 = scalar_lea.sflag [#allocation4], 1
    %2086 = vsyncpa %s2085, 1

</llo_original>
